<compile_context>
chip_gen: v5e
topology: v5e:2x2
jax: 0.10.0
libtpu: 0.0.40
codegen_flags: <defaults>
</compile_context>

<pallas_src>
import jax
import jax.numpy as jnp
from jax import lax
from jax.experimental import pallas as pl
from jax.experimental.pallas import tpu as pltpu


# ----------------------------- config (TaskConfig fields used by CRNN) -------
class TaskConfig:
    n_mels = 16
    cnn_out_channels = 4
    kernel_size = (4, 4)
    stride = (2, 2)
    hidden_size = 32
    gru_num_layers = 1
    bidirectional = False
    num_classes = 4


# ----------------------------- fused Pallas kernel ---------------------------
def crnn_fused_kernel(p_ref, wx_ref, bx_ref, whh_ref, bhn_ref,
                      aw1_ref, ab1_ref, aw2_ref, ab2_ref,
                      cw_ref, cb_ref, out_ref, gx_scr, g_scr):
    # p_ref : (T*Bb, FK)  im2col patches, rows ordered (t, batch-within-block)
    # gx_scr: (T*Bb, 3H)  input-side gate pre-activations (conv folded in)
    # g_scr : (T*Bb, H)   GRU outputs, same row ordering
    Bb = out_ref.shape[0]
    H = whh_ref.shape[0]
    H3 = whh_ref.shape[1]
    T = gx_scr.shape[0] // Bb

    # ---- conv (+) GRU input projection for ALL timesteps: one MXU matmul ----
    gx_scr[...] = (
        jnp.dot(p_ref[...], wx_ref[...], preferred_element_type=jnp.float32)
        + bx_ref[...]
    )

    # ---- hoist loop-invariant loads (JAX does not CSE broadcasts) -----------
    w_hh = whh_ref[...]          # (H, 3H), gates r|z|n fused along lanes
    b_hn = bhn_ref[...]          # (1, H)   (must stay inside r * (.) term)

    # ---- GRU recurrence: only h @ W_hh is truly serial ----------------------
    # T is static -> fully unrolled; loop body holds nothing but the recurrence.
    h = jnp.zeros((Bb, H), jnp.float32)
    for t in range(T):
        gxt = gx_scr[pl.ds(t * Bb, Bb), :]                               # (Bb, 3H)
        gh = jnp.dot(h, w_hh, preferred_element_type=jnp.float32)        # (Bb, 3H)
        r = jax.nn.sigmoid(gxt[:, 0:H] + gh[:, 0:H])
        z = jax.nn.sigmoid(gxt[:, H:2 * H] + gh[:, H:2 * H])
        n = jnp.tanh(gxt[:, 2 * H:H3] + r * (gh[:, 2 * H:H3] + b_hn))
        h = (1.0 - z) * n + z * h
        g_scr[pl.ds(t * Bb, Bb), :] = h

    # ---- attention energies for ALL timesteps: two batched MXU matmuls ------
    # aw2 / ab2 arrive lane-replicated (H columns identical), so the energy is a
    # full-lane-width array and the softmax stays purely elementwise + VPU adds.
    G = g_scr[...]                                                        # (T*Bb, H)
    hid = jnp.tanh(
        jnp.dot(G, aw1_ref[...], preferred_element_type=jnp.float32) + ab1_ref[...]
    )
    e = jnp.dot(hid, aw2_ref[...], preferred_element_type=jnp.float32) + ab2_ref[...]

    # ---- softmax over time + context + classifier ---------------------------
    e3 = e.reshape(T, Bb, H)                                              # rows grouped by 8
    e3 = e3 - jnp.max(e3, axis=0, keepdims=True)
    p = jnp.exp(e3)
    alpha = p * pl.reciprocal(jnp.sum(p, axis=0, keepdims=True), approx=True)
    ctx = jnp.sum(G.reshape(T, Bb, H) * alpha, axis=0)                    # (Bb, H)
    out_ref[...] = (
        jnp.dot(ctx, cw_ref[...], preferred_element_type=jnp.float32) + cb_ref[...]
    )


# ----------------------------- glue (plain JAX: layout + weight folding) -----
def im2col(x, kh, kw, sh, sw):
    B, F, T = x.shape
    Fo = (F - kh) // sh + 1
    To = (T - kw) // sw + 1
    cols = []
    for i in range(kh):
        for j in range(kw):
            cols.append(x[:, i:i + sh * (Fo - 1) + 1:sh, j:j + sw * (To - 1) + 1:sw])
    return jnp.stack(cols, axis=-1), Fo, To                               # (B, Fo, To, kh*kw)


def crnn_forward(params, x, cfg):
    kh, kw = cfg.kernel_size
    sh, sw = cfg.stride
    C, H, NC = cfg.cnn_out_channels, cfg.hidden_size, cfg.num_classes
    B = x.shape[0]
    K = kh * kw

    patches, Fo, To = im2col(x, kh, kw, sh, sw)                           # (B, Fo, To, K)
    FK = Fo * K
    D = C * Fo
    H3 = 3 * H

    # time-major patch rows: patches_t[t, b, f*K + k] = x[b, f*sh+i, t*sw+j]
    patches_t = jnp.transpose(patches, (2, 0, 1, 3)).reshape(To, B, FK)

    # ---- fold conv into the GRU input projection (both linear maps) ---------
    # feat[b,t,c*Fo+f] = sum_k patches_t[t,b,f*K+k]*conv_w[k,c] + conv_b[c]
    # gates_x = feat @ W_ih + b_ih  =>  patches_t @ (W_big @ W_ih) + b_x
    prec = lax.Precision.HIGHEST
    w_big = jnp.einsum("kc,fg->fkcg", params["conv_w"],
                       jnp.eye(Fo, dtype=jnp.float32),
                       precision=prec).reshape(FK, D)                     # block-structured conv
    b_big = jnp.repeat(params["conv_b"].reshape(C), Fo)[None, :]          # (1, D)

    w_ih = jnp.concatenate([params["w_ih"][0], params["w_ih"][1], params["w_ih"][2]], axis=1)  # (D, 3H)
    b_ih = jnp.concatenate([params["b_ih"][0], params["b_ih"][1], params["b_ih"][2]], axis=1)  # (1, 3H)
    w_hh = jnp.concatenate([params["w_hh"][0], params["w_hh"][1], params["w_hh"][2]], axis=1)  # (H, 3H)
    # hidden biases of r,z gates fold into the input-side bias; b_hn cannot (scaled by r).
    b_hrz = jnp.concatenate([params["b_hh"][0], params["b_hh"][1],
                             jnp.zeros((1, H), jnp.float32)], axis=1)

    w_x = jnp.dot(w_big, w_ih, precision=prec)                            # (FK, 3H)
    b_x = jnp.dot(b_big, w_ih, precision=prec) + b_ih + b_hrz             # (1, 3H)
    b_hn = params["b_hh"][2]                                              # (1, H)

    # lane-replicate the (H,1) attention projection so the kernel never touches
    # lane-width-1 vectors (all H columns identical -> identical softmax).
    aw2_rep = jnp.tile(params["att_w2"], (1, H))                          # (H, H)
    ab2_rep = jnp.tile(params["att_b2"], (1, H))                          # (1, H)

    # ---- batch blocking: full sublane tile (8 sequences) per grid step ------
    B_blk = 8
    n_blk = int(pl.cdiv(B, B_blk))
    Bp = n_blk * B_blk
    if Bp != B:
        patches_t = jnp.pad(patches_t, ((0, 0), (0, Bp - B), (0, 0)))
    # rows ordered (block, t, batch-within-block) -> each grid step gets a dense 2D tile
    p2d = (patches_t.reshape(To, n_blk, B_blk, FK)
           .transpose(1, 0, 2, 3)
           .reshape(n_blk, To * B_blk, FK))

    out = pl.pallas_call(
        crnn_fused_kernel,
        out_shape=jax.ShapeDtypeStruct((Bp, NC), jnp.float32),
        grid=(n_blk,),
        in_specs=[
            pl.BlockSpec((None, To * B_blk, FK), lambda b: (b, 0, 0)),    # patches (per block)
            pl.BlockSpec((FK, H3), lambda b: (0, 0)),                     # fused conv+W_ih
            pl.BlockSpec((1, H3), lambda b: (0, 0)),                      # fused bias
            pl.BlockSpec((H, H3), lambda b: (0, 0)),                      # W_hh (r|z|n)
            pl.BlockSpec((1, H), lambda b: (0, 0)),                       # b_hn
            pl.BlockSpec((H, H), lambda b: (0, 0)),                       # att W1
            pl.BlockSpec((1, H), lambda b: (0, 0)),                       # att b1
            pl.BlockSpec((H, H), lambda b: (0, 0)),                       # att W2 (lane-replicated)
            pl.BlockSpec((1, H), lambda b: (0, 0)),                       # att b2 (lane-replicated)
            pl.BlockSpec((H, NC), lambda b: (0, 0)),                      # classifier W
            pl.BlockSpec((1, NC), lambda b: (0, 0)),                      # classifier b
        ],
        out_specs=pl.BlockSpec((B_blk, NC), lambda b: (b, 0)),
        scratch_shapes=[
            pltpu.VMEM((To * B_blk, H3), jnp.float32),   # gate pre-activations (all t)
            pltpu.VMEM((To * B_blk, H), jnp.float32),    # GRU outputs (all t)
        ],
        compiler_params=pltpu.CompilerParams(
            dimension_semantics=("parallel",)),          # batch blocks are independent
    )(p2d, w_x, b_x, w_hh, b_hn,
      params["att_w1"], params["att_b1"], aw2_rep, ab2_rep,
      params["cls_w"], params["cls_b"])
    return out[:B]


# ----------------------------- pure-JAX reference ------------------------------
def crnn_reference(params, x, cfg):
    kh, kw = cfg.kernel_size
    sh, sw = cfg.stride
    C, H = cfg.cnn_out_channels, cfg.hidden_size
    patches, Fo, To = im2col(x, kh, kw, sh, sw)
    with jax.default_matmul_precision("float32"):
        conv = jnp.einsum("bftk,kc->bftc", patches, params["conv_w"]) + params["conv_b"][0]
        feat = jnp.transpose(conv, (0, 2, 3, 1)).reshape(x.shape[0], To, C * Fo)

        def run_one(f):
            def step(h, x_t):
                x_t = x_t[None]
                r = jax.nn.sigmoid(x_t @ params["w_ih"][0] + params["b_ih"][0]
                                   + h @ params["w_hh"][0] + params["b_hh"][0])
                z = jax.nn.sigmoid(x_t @ params["w_ih"][1] + params["b_ih"][1]
                                   + h @ params["w_hh"][1] + params["b_hh"][1])
                n = jnp.tanh(x_t @ params["w_ih"][2] + params["b_ih"][2]
                             + r * (h @ params["w_hh"][2] + params["b_hh"][2]))
                h_new = (1.0 - z) * n + z * h
                return h_new, h_new[0]
            _, G = lax.scan(step, jnp.zeros((1, H), jnp.float32), f)
            e = jnp.tanh(G @ params["att_w1"] + params["att_b1"]) @ params["att_w2"] + params["att_b2"]
            alpha = jax.nn.softmax(e, axis=0)
            ctx = jnp.sum(G * alpha, axis=0, keepdims=True)
            return (ctx @ params["cls_w"] + params["cls_b"])[0]

        return jax.vmap(run_one)(feat)


# ----------------------------- params ------------------------------------------
def init_params(cfg, key):
    kh, kw = cfg.kernel_size
    K = kh * kw
    C = cfg.cnn_out_channels
    Fo = (cfg.n_mels - kh) // cfg.stride[0] + 1
    D = C * Fo
    H, NC = cfg.hidden_size, cfg.num_classes
    ks = jax.random.split(key, 12)
    s = 0.1
    return {
        "conv_w": jax.random.normal(ks[0], (K, C), jnp.float32) * s,      # [k, c] = torch conv.weight[c,0,i,j]
        "conv_b": jax.random.normal(ks[1], (1, C), jnp.float32) * s,
        "w_ih": jax.random.normal(ks[2], (3, D, H), jnp.float32) * s,     # gates r,z,n; transposed vs torch
        "w_hh": jax.random.normal(ks[3], (3, H, H), jnp.float32) * s,
        "b_ih": jax.random.normal(ks[4], (3, 1, H), jnp.float32) * s,
        "b_hh": jax.random.normal(ks[5], (3, 1, H), jnp.float32) * s,
        "att_w1": jax.random.normal(ks[6], (H, H), jnp.float32) * s,
        "att_b1": jax.random.normal(ks[7], (1, H), jnp.float32) * s,
        "att_w2": jax.random.normal(ks[8], (H, 1), jnp.float32) * s,
        "att_b2": jax.random.normal(ks[9], (1, 1), jnp.float32) * s,
        "cls_w": jax.random.normal(ks[10], (H, NC), jnp.float32) * s,
        "cls_b": jax.random.normal(ks[11], (1, NC), jnp.float32) * s,
    }


# ----------------------------- main ---------------------------------------------
if __name__ == "__main__":
    cfg = TaskConfig()
    key = jax.random.PRNGKey(0)
    kp, kx = jax.random.split(key)
    params = init_params(cfg, kp)

    B, T_in = 2, 16
    x = jax.random.normal(kx, (B, cfg.n_mels, T_in), jnp.float32)  # (B, n_mels, T)

    out = jax.block_until_ready(crnn_forward(params, x, cfg))
    ref = jax.block_until_ready(crnn_reference(params, x, cfg))

    assert out.shape == (B, cfg.num_classes), out.shape
    assert bool(jnp.all(jnp.isfinite(out)))
    max_diff = float(jnp.max(jnp.abs(out - ref)))
    assert max_diff < 1e-2, f"mismatch vs reference: {max_diff}"
    print("KERNEL_OK")
</pallas_src>

<mosaic_0001>
module attributes {stable_mosaic.version = 11 : i64} {
  func.func @crnn_fused_kernel(%arg0: i32, %arg1: memref<1x56x112xf32, #tpu.memory_space<vmem>>, %arg2: memref<112x96xf32, #tpu.memory_space<vmem>>, %arg3: memref<1x96xf32, #tpu.memory_space<vmem>>, %arg4: memref<32x96xf32, #tpu.memory_space<vmem>>, %arg5: memref<1x32xf32, #tpu.memory_space<vmem>>, %arg6: memref<32x32xf32, #tpu.memory_space<vmem>>, %arg7: memref<1x32xf32, #tpu.memory_space<vmem>>, %arg8: memref<32x32xf32, #tpu.memory_space<vmem>>, %arg9: memref<1x32xf32, #tpu.memory_space<vmem>>, %arg10: memref<32x4xf32, #tpu.memory_space<vmem>>, %arg11: memref<1x4xf32, #tpu.memory_space<vmem>>, %arg12: memref<8x4xf32, #tpu.memory_space<vmem>>, %arg13: memref<56x96xf32, #tpu.memory_space<vmem>>, %arg14: memref<56x32xf32, #tpu.memory_space<vmem>>) attributes {dimension_semantics = [#tpu.dimension_semantics<parallel>], iteration_bounds = array<i64: 1>, scalar_prefetch = 0 : i64, scratch_operands = 2 : i64, tpu.core_type = #tpu.core_type<tc>, window_params = [{transform_indices = @transform_0, window_bounds = array<i64: 1, 56, 112>}, {pipeline_mode = #tpu.pipeline_mode<synchronous>, transform_indices = @transform_1, window_bounds = array<i64: 112, 96>}, {pipeline_mode = #tpu.pipeline_mode<synchronous>, transform_indices = @transform_2, window_bounds = array<i64: 1, 96>}, {pipeline_mode = #tpu.pipeline_mode<synchronous>, transform_indices = @transform_3, window_bounds = array<i64: 32, 96>}, {pipeline_mode = #tpu.pipeline_mode<synchronous>, transform_indices = @transform_4, window_bounds = array<i64: 1, 32>}, {pipeline_mode = #tpu.pipeline_mode<synchronous>, transform_indices = @transform_5, window_bounds = array<i64: 32, 32>}, {pipeline_mode = #tpu.pipeline_mode<synchronous>, transform_indices = @transform_6, window_bounds = array<i64: 1, 32>}, {pipeline_mode = #tpu.pipeline_mode<synchronous>, transform_indices = @transform_7, window_bounds = array<i64: 32, 32>}, {pipeline_mode = #tpu.pipeline_mode<synchronous>, transform_indices = @transform_8, window_bounds = array<i64: 1, 32>}, {pipeline_mode = #tpu.pipeline_mode<synchronous>, transform_indices = @transform_9, window_bounds = array<i64: 32, 4>}, {pipeline_mode = #tpu.pipeline_mode<synchronous>, transform_indices = @transform_10, window_bounds = array<i64: 1, 4>}, {transform_indices = @transform_11, window_bounds = array<i64: 8, 4>}]} {
    %c0 = arith.constant 0 : index
    %c0_0 = arith.constant 0 : index
    %c0_1 = arith.constant 0 : index
    %0 = vector.load %arg1[%c0, %c0_0, %c0_1] : memref<1x56x112xf32, #tpu.memory_space<vmem>>, vector<1x56x112xf32>
    %1 = vector.shape_cast %0 : vector<1x56x112xf32> to vector<56x112xf32>
    %c0_2 = arith.constant 0 : index
    %c0_3 = arith.constant 0 : index
    %2 = vector.load %arg2[%c0_2, %c0_3] : memref<112x96xf32, #tpu.memory_space<vmem>>, vector<112x96xf32>
    %cst = arith.constant dense<0.000000e+00> : vector<56x96xf32>
    %3 = tpu.matmul %1, %2, %cst {dimension_numbers = #tpu.dot_dimension_numbers<[1], [0], [0], [1], [0, 0, 1, 1], [], []>} : vector<56x112xf32>, vector<112x96xf32>, vector<56x96xf32> -> vector<56x96xf32>
    %c0_4 = arith.constant 0 : index
    %c0_5 = arith.constant 0 : index
    %4 = vector.load %arg3[%c0_4, %c0_5] : memref<1x96xf32, #tpu.memory_space<vmem>>, vector<1x96xf32>
    %5 = vector.broadcast %4 : vector<1x96xf32> to vector<56x96xf32>
    %6 = arith.addf %3, %5 : vector<56x96xf32>
    %c0_6 = arith.constant 0 : index
    %c0_7 = arith.constant 0 : index
    %7 = vector.load %arg13[%c0_6, %c0_7] : memref<56x96xf32, #tpu.memory_space<vmem>>, vector<56x96xf32>
    tpu.vector_store %arg13[%c0_6, %c0_7], %6 {strides = array<i32>} : memref<56x96xf32, #tpu.memory_space<vmem>>, vector<56x96xf32>,
    %c0_8 = arith.constant 0 : index
    %c0_9 = arith.constant 0 : index
    %8 = vector.load %arg4[%c0_8, %c0_9] : memref<32x96xf32, #tpu.memory_space<vmem>>, vector<32x96xf32>
    %c0_10 = arith.constant 0 : index
    %c0_11 = arith.constant 0 : index
    %9 = vector.load %arg5[%c0_10, %c0_11] : memref<1x32xf32, #tpu.memory_space<vmem>>, vector<1x32xf32>
    %cst_12 = arith.constant 0.000000e+00 : f32
    %10 = vector.broadcast %cst_12 : f32 to vector<8x32xf32>
    %c0_13 = arith.constant 0 : index
    %c0_14 = arith.constant 0 : index
    %11 = vector.load %arg13[%c0_13, %c0_14] : memref<56x96xf32, #tpu.memory_space<vmem>>, vector<8x96xf32>
    %cst_15 = arith.constant dense<0.000000e+00> : vector<8x96xf32>
    %12 = tpu.matmul %10, %8, %cst_15 {dimension_numbers = #tpu.dot_dimension_numbers<[1], [0], [0], [1], [0, 0, 1, 1], [], []>} : vector<8x32xf32>, vector<32x96xf32>, vector<8x96xf32> -> vector<8x96xf32>
    %13 = vector.extract_strided_slice %11 {offsets = [0, 0], sizes = [8, 32], strides = [1, 1]} : vector<8x96xf32> to vector<8x32xf32>
    %14 = vector.extract_strided_slice %12 {offsets = [0, 0], sizes = [8, 32], strides = [1, 1]} : vector<8x96xf32> to vector<8x32xf32>
    %15 = arith.addf %13, %14 : vector<8x32xf32>
    %16 = arith.negf %15 : vector<8x32xf32>
    %17 = math.exp %16 : vector<8x32xf32>
    %cst_16 = arith.constant 1.000000e+00 : f32
    %18 = vector.broadcast %cst_16 : f32 to vector<8x32xf32>
    %19 = arith.addf %18, %17 : vector<8x32xf32>
    %20 = arith.divf %18, %19 : vector<8x32xf32>
    %21 = vector.extract_strided_slice %11 {offsets = [0, 32], sizes = [8, 32], strides = [1, 1]} : vector<8x96xf32> to vector<8x32xf32>
    %22 = vector.extract_strided_slice %12 {offsets = [0, 32], sizes = [8, 32], strides = [1, 1]} : vector<8x96xf32> to vector<8x32xf32>
    %23 = arith.addf %21, %22 : vector<8x32xf32>
    %24 = arith.negf %23 : vector<8x32xf32>
    %25 = math.exp %24 : vector<8x32xf32>
    %cst_17 = arith.constant 1.000000e+00 : f32
    %26 = vector.broadcast %cst_17 : f32 to vector<8x32xf32>
    %27 = arith.addf %26, %25 : vector<8x32xf32>
    %28 = arith.divf %26, %27 : vector<8x32xf32>
    %29 = vector.extract_strided_slice %11 {offsets = [0, 64], sizes = [8, 32], strides = [1, 1]} : vector<8x96xf32> to vector<8x32xf32>
    %30 = vector.extract_strided_slice %12 {offsets = [0, 64], sizes = [8, 32], strides = [1, 1]} : vector<8x96xf32> to vector<8x32xf32>
    %31 = vector.broadcast %9 : vector<1x32xf32> to vector<8x32xf32>
    %32 = arith.addf %30, %31 : vector<8x32xf32>
    %33 = arith.mulf %20, %32 : vector<8x32xf32>
    %34 = arith.addf %29, %33 : vector<8x32xf32>
    %35 = math.tanh %34 : vector<8x32xf32>
    %cst_18 = arith.constant 1.000000e+00 : f32
    %36 = vector.broadcast %cst_18 : f32 to vector<8x32xf32>
    %37 = arith.subf %36, %28 : vector<8x32xf32>
    %38 = arith.mulf %37, %35 : vector<8x32xf32>
    %39 = arith.mulf %28, %10 : vector<8x32xf32>
    %40 = arith.addf %38, %39 : vector<8x32xf32>
    %c0_19 = arith.constant 0 : index
    %c0_20 = arith.constant 0 : index
    %41 = vector.load %arg14[%c0_19, %c0_20] : memref<56x32xf32, #tpu.memory_space<vmem>>, vector<8x32xf32>
    tpu.vector_store %arg14[%c0_19, %c0_20], %40 {strides = array<i32>} : memref<56x32xf32, #tpu.memory_space<vmem>>, vector<8x32xf32>,
    %c8 = arith.constant 8 : index
    %c0_21 = arith.constant 0 : index
    %42 = vector.load %arg13[%c8, %c0_21] : memref<56x96xf32, #tpu.memory_space<vmem>>, vector<8x96xf32>
    %cst_22 = arith.constant dense<0.000000e+00> : vector<8x96xf32>
    %43 = tpu.matmul %40, %8, %cst_22 {dimension_numbers = #tpu.dot_dimension_numbers<[1], [0], [0], [1], [0, 0, 1, 1], [], []>} : vector<8x32xf32>, vector<32x96xf32>, vector<8x96xf32> -> vector<8x96xf32>
    %44 = vector.extract_strided_slice %42 {offsets = [0, 0], sizes = [8, 32], strides = [1, 1]} : vector<8x96xf32> to vector<8x32xf32>
    %45 = vector.extract_strided_slice %43 {offsets = [0, 0], sizes = [8, 32], strides = [1, 1]} : vector<8x96xf32> to vector<8x32xf32>
    %46 = arith.addf %44, %45 : vector<8x32xf32>
    %47 = arith.negf %46 : vector<8x32xf32>
    %48 = math.exp %47 : vector<8x32xf32>
    %cst_23 = arith.constant 1.000000e+00 : f32
    %49 = vector.broadcast %cst_23 : f32 to vector<8x32xf32>
    %50 = arith.addf %49, %48 : vector<8x32xf32>
    %51 = arith.divf %49, %50 : vector<8x32xf32>
    %52 = vector.extract_strided_slice %42 {offsets = [0, 32], sizes = [8, 32], strides = [1, 1]} : vector<8x96xf32> to vector<8x32xf32>
    %53 = vector.extract_strided_slice %43 {offsets = [0, 32], sizes = [8, 32], strides = [1, 1]} : vector<8x96xf32> to vector<8x32xf32>
    %54 = arith.addf %52, %53 : vector<8x32xf32>
    %55 = arith.negf %54 : vector<8x32xf32>
    %56 = math.exp %55 : vector<8x32xf32>
    %cst_24 = arith.constant 1.000000e+00 : f32
    %57 = vector.broadcast %cst_24 : f32 to vector<8x32xf32>
    %58 = arith.addf %57, %56 : vector<8x32xf32>
    %59 = arith.divf %57, %58 : vector<8x32xf32>
    %60 = vector.extract_strided_slice %42 {offsets = [0, 64], sizes = [8, 32], strides = [1, 1]} : vector<8x96xf32> to vector<8x32xf32>
    %61 = vector.extract_strided_slice %43 {offsets = [0, 64], sizes = [8, 32], strides = [1, 1]} : vector<8x96xf32> to vector<8x32xf32>
    %62 = vector.broadcast %9 : vector<1x32xf32> to vector<8x32xf32>
    %63 = arith.addf %61, %62 : vector<8x32xf32>
    %64 = arith.mulf %51, %63 : vector<8x32xf32>
    %65 = arith.addf %60, %64 : vector<8x32xf32>
    %66 = math.tanh %65 : vector<8x32xf32>
    %cst_25 = arith.constant 1.000000e+00 : f32
    %67 = vector.broadcast %cst_25 : f32 to vector<8x32xf32>
    %68 = arith.subf %67, %59 : vector<8x32xf32>
    %69 = arith.mulf %68, %66 : vector<8x32xf32>
    %70 = arith.mulf %59, %40 : vector<8x32xf32>
    %71 = arith.addf %69, %70 : vector<8x32xf32>
    %c8_26 = arith.constant 8 : index
    %c0_27 = arith.constant 0 : index
    %72 = vector.load %arg14[%c8_26, %c0_27] : memref<56x32xf32, #tpu.memory_space<vmem>>, vector<8x32xf32>
    tpu.vector_store %arg14[%c8_26, %c0_27], %71 {strides = array<i32>} : memref<56x32xf32, #tpu.memory_space<vmem>>, vector<8x32xf32>,
    %c16 = arith.constant 16 : index
    %c0_28 = arith.constant 0 : index
    %73 = vector.load %arg13[%c16, %c0_28] : memref<56x96xf32, #tpu.memory_space<vmem>>, vector<8x96xf32>
    %cst_29 = arith.constant dense<0.000000e+00> : vector<8x96xf32>
    %74 = tpu.matmul %71, %8, %cst_29 {dimension_numbers = #tpu.dot_dimension_numbers<[1], [0], [0], [1], [0, 0, 1, 1], [], []>} : vector<8x32xf32>, vector<32x96xf32>, vector<8x96xf32> -> vector<8x96xf32>
    %75 = vector.extract_strided_slice %73 {offsets = [0, 0], sizes = [8, 32], strides = [1, 1]} : vector<8x96xf32> to vector<8x32xf32>
    %76 = vector.extract_strided_slice %74 {offsets = [0, 0], sizes = [8, 32], strides = [1, 1]} : vector<8x96xf32> to vector<8x32xf32>
    %77 = arith.addf %75, %76 : vector<8x32xf32>
    %78 = arith.negf %77 : vector<8x32xf32>
    %79 = math.exp %78 : vector<8x32xf32>
    %cst_30 = arith.constant 1.000000e+00 : f32
    %80 = vector.broadcast %cst_30 : f32 to vector<8x32xf32>
    %81 = arith.addf %80, %79 : vector<8x32xf32>
    %82 = arith.divf %80, %81 : vector<8x32xf32>
    %83 = vector.extract_strided_slice %73 {offsets = [0, 32], sizes = [8, 32], strides = [1, 1]} : vector<8x96xf32> to vector<8x32xf32>
    %84 = vector.extract_strided_slice %74 {offsets = [0, 32], sizes = [8, 32], strides = [1, 1]} : vector<8x96xf32> to vector<8x32xf32>
    %85 = arith.addf %83, %84 : vector<8x32xf32>
    %86 = arith.negf %85 : vector<8x32xf32>
    %87 = math.exp %86 : vector<8x32xf32>
    %cst_31 = arith.constant 1.000000e+00 : f32
    %88 = vector.broadcast %cst_31 : f32 to vector<8x32xf32>
    %89 = arith.addf %88, %87 : vector<8x32xf32>
    %90 = arith.divf %88, %89 : vector<8x32xf32>
    %91 = vector.extract_strided_slice %73 {offsets = [0, 64], sizes = [8, 32], strides = [1, 1]} : vector<8x96xf32> to vector<8x32xf32>
    %92 = vector.extract_strided_slice %74 {offsets = [0, 64], sizes = [8, 32], strides = [1, 1]} : vector<8x96xf32> to vector<8x32xf32>
    %93 = vector.broadcast %9 : vector<1x32xf32> to vector<8x32xf32>
    %94 = arith.addf %92, %93 : vector<8x32xf32>
    %95 = arith.mulf %82, %94 : vector<8x32xf32>
    %96 = arith.addf %91, %95 : vector<8x32xf32>
    %97 = math.tanh %96 : vector<8x32xf32>
    %cst_32 = arith.constant 1.000000e+00 : f32
    %98 = vector.broadcast %cst_32 : f32 to vector<8x32xf32>
    %99 = arith.subf %98, %90 : vector<8x32xf32>
    %100 = arith.mulf %99, %97 : vector<8x32xf32>
    %101 = arith.mulf %90, %71 : vector<8x32xf32>
    %102 = arith.addf %100, %101 : vector<8x32xf32>
    %c16_33 = arith.constant 16 : index
    %c0_34 = arith.constant 0 : index
    %103 = vector.load %arg14[%c16_33, %c0_34] : memref<56x32xf32, #tpu.memory_space<vmem>>, vector<8x32xf32>
    tpu.vector_store %arg14[%c16_33, %c0_34], %102 {strides = array<i32>} : memref<56x32xf32, #tpu.memory_space<vmem>>, vector<8x32xf32>,
    %c24 = arith.constant 24 : index
    %c0_35 = arith.constant 0 : index
    %104 = vector.load %arg13[%c24, %c0_35] : memref<56x96xf32, #tpu.memory_space<vmem>>, vector<8x96xf32>
    %cst_36 = arith.constant dense<0.000000e+00> : vector<8x96xf32>
    %105 = tpu.matmul %102, %8, %cst_36 {dimension_numbers = #tpu.dot_dimension_numbers<[1], [0], [0], [1], [0, 0, 1, 1], [], []>} : vector<8x32xf32>, vector<32x96xf32>, vector<8x96xf32> -> vector<8x96xf32>
    %106 = vector.extract_strided_slice %104 {offsets = [0, 0], sizes = [8, 32], strides = [1, 1]} : vector<8x96xf32> to vector<8x32xf32>
    %107 = vector.extract_strided_slice %105 {offsets = [0, 0], sizes = [8, 32], strides = [1, 1]} : vector<8x96xf32> to vector<8x32xf32>
    %108 = arith.addf %106, %107 : vector<8x32xf32>
    %109 = arith.negf %108 : vector<8x32xf32>
    %110 = math.exp %109 : vector<8x32xf32>
    %cst_37 = arith.constant 1.000000e+00 : f32
    %111 = vector.broadcast %cst_37 : f32 to vector<8x32xf32>
    %112 = arith.addf %111, %110 : vector<8x32xf32>
    %113 = arith.divf %111, %112 : vector<8x32xf32>
    %114 = vector.extract_strided_slice %104 {offsets = [0, 32], sizes = [8, 32], strides = [1, 1]} : vector<8x96xf32> to vector<8x32xf32>
    %115 = vector.extract_strided_slice %105 {offsets = [0, 32], sizes = [8, 32], strides = [1, 1]} : vector<8x96xf32> to vector<8x32xf32>
    %116 = arith.addf %114, %115 : vector<8x32xf32>
    %117 = arith.negf %116 : vector<8x32xf32>
    %118 = math.exp %117 : vector<8x32xf32>
    %cst_38 = arith.constant 1.000000e+00 : f32
    %119 = vector.broadcast %cst_38 : f32 to vector<8x32xf32>
    %120 = arith.addf %119, %118 : vector<8x32xf32>
    %121 = arith.divf %119, %120 : vector<8x32xf32>
    %122 = vector.extract_strided_slice %104 {offsets = [0, 64], sizes = [8, 32], strides = [1, 1]} : vector<8x96xf32> to vector<8x32xf32>
    %123 = vector.extract_strided_slice %105 {offsets = [0, 64], sizes = [8, 32], strides = [1, 1]} : vector<8x96xf32> to vector<8x32xf32>
    %124 = vector.broadcast %9 : vector<1x32xf32> to vector<8x32xf32>
    %125 = arith.addf %123, %124 : vector<8x32xf32>
    %126 = arith.mulf %113, %125 : vector<8x32xf32>
    %127 = arith.addf %122, %126 : vector<8x32xf32>
    %128 = math.tanh %127 : vector<8x32xf32>
    %cst_39 = arith.constant 1.000000e+00 : f32
    %129 = vector.broadcast %cst_39 : f32 to vector<8x32xf32>
    %130 = arith.subf %129, %121 : vector<8x32xf32>
    %131 = arith.mulf %130, %128 : vector<8x32xf32>
    %132 = arith.mulf %121, %102 : vector<8x32xf32>
    %133 = arith.addf %131, %132 : vector<8x32xf32>
    %c24_40 = arith.constant 24 : index
    %c0_41 = arith.constant 0 : index
    %134 = vector.load %arg14[%c24_40, %c0_41] : memref<56x32xf32, #tpu.memory_space<vmem>>, vector<8x32xf32>
    tpu.vector_store %arg14[%c24_40, %c0_41], %133 {strides = array<i32>} : memref<56x32xf32, #tpu.memory_space<vmem>>, vector<8x32xf32>,
    %c32 = arith.constant 32 : index
    %c0_42 = arith.constant 0 : index
    %135 = vector.load %arg13[%c32, %c0_42] : memref<56x96xf32, #tpu.memory_space<vmem>>, vector<8x96xf32>
    %cst_43 = arith.constant dense<0.000000e+00> : vector<8x96xf32>
    %136 = tpu.matmul %133, %8, %cst_43 {dimension_numbers = #tpu.dot_dimension_numbers<[1], [0], [0], [1], [0, 0, 1, 1], [], []>} : vector<8x32xf32>, vector<32x96xf32>, vector<8x96xf32> -> vector<8x96xf32>
    %137 = vector.extract_strided_slice %135 {offsets = [0, 0], sizes = [8, 32], strides = [1, 1]} : vector<8x96xf32> to vector<8x32xf32>
    %138 = vector.extract_strided_slice %136 {offsets = [0, 0], sizes = [8, 32], strides = [1, 1]} : vector<8x96xf32> to vector<8x32xf32>
    %139 = arith.addf %137, %138 : vector<8x32xf32>
    %140 = arith.negf %139 : vector<8x32xf32>
    %141 = math.exp %140 : vector<8x32xf32>
    %cst_44 = arith.constant 1.000000e+00 : f32
    %142 = vector.broadcast %cst_44 : f32 to vector<8x32xf32>
    %143 = arith.addf %142, %141 : vector<8x32xf32>
    %144 = arith.divf %142, %143 : vector<8x32xf32>
    %145 = vector.extract_strided_slice %135 {offsets = [0, 32], sizes = [8, 32], strides = [1, 1]} : vector<8x96xf32> to vector<8x32xf32>
    %146 = vector.extract_strided_slice %136 {offsets = [0, 32], sizes = [8, 32], strides = [1, 1]} : vector<8x96xf32> to vector<8x32xf32>
    %147 = arith.addf %145, %146 : vector<8x32xf32>
    %148 = arith.negf %147 : vector<8x32xf32>
    %149 = math.exp %148 : vector<8x32xf32>
    %cst_45 = arith.constant 1.000000e+00 : f32
    %150 = vector.broadcast %cst_45 : f32 to vector<8x32xf32>
    %151 = arith.addf %150, %149 : vector<8x32xf32>
    %152 = arith.divf %150, %151 : vector<8x32xf32>
    %153 = vector.extract_strided_slice %135 {offsets = [0, 64], sizes = [8, 32], strides = [1, 1]} : vector<8x96xf32> to vector<8x32xf32>
    %154 = vector.extract_strided_slice %136 {offsets = [0, 64], sizes = [8, 32], strides = [1, 1]} : vector<8x96xf32> to vector<8x32xf32>
    %155 = vector.broadcast %9 : vector<1x32xf32> to vector<8x32xf32>
    %156 = arith.addf %154, %155 : vector<8x32xf32>
    %157 = arith.mulf %144, %156 : vector<8x32xf32>
    %158 = arith.addf %153, %157 : vector<8x32xf32>
    %159 = math.tanh %158 : vector<8x32xf32>
    %cst_46 = arith.constant 1.000000e+00 : f32
    %160 = vector.broadcast %cst_46 : f32 to vector<8x32xf32>
    %161 = arith.subf %160, %152 : vector<8x32xf32>
    %162 = arith.mulf %161, %159 : vector<8x32xf32>
    %163 = arith.mulf %152, %133 : vector<8x32xf32>
    %164 = arith.addf %162, %163 : vector<8x32xf32>
    %c32_47 = arith.constant 32 : index
    %c0_48 = arith.constant 0 : index
    %165 = vector.load %arg14[%c32_47, %c0_48] : memref<56x32xf32, #tpu.memory_space<vmem>>, vector<8x32xf32>
    tpu.vector_store %arg14[%c32_47, %c0_48], %164 {strides = array<i32>} : memref<56x32xf32, #tpu.memory_space<vmem>>, vector<8x32xf32>,
    %c40 = arith.constant 40 : index
    %c0_49 = arith.constant 0 : index
    %166 = vector.load %arg13[%c40, %c0_49] : memref<56x96xf32, #tpu.memory_space<vmem>>, vector<8x96xf32>
    %cst_50 = arith.constant dense<0.000000e+00> : vector<8x96xf32>
    %167 = tpu.matmul %164, %8, %cst_50 {dimension_numbers = #tpu.dot_dimension_numbers<[1], [0], [0], [1], [0, 0, 1, 1], [], []>} : vector<8x32xf32>, vector<32x96xf32>, vector<8x96xf32> -> vector<8x96xf32>
    %168 = vector.extract_strided_slice %166 {offsets = [0, 0], sizes = [8, 32], strides = [1, 1]} : vector<8x96xf32> to vector<8x32xf32>
    %169 = vector.extract_strided_slice %167 {offsets = [0, 0], sizes = [8, 32], strides = [1, 1]} : vector<8x96xf32> to vector<8x32xf32>
    %170 = arith.addf %168, %169 : vector<8x32xf32>
    %171 = arith.negf %170 : vector<8x32xf32>
    %172 = math.exp %171 : vector<8x32xf32>
    %cst_51 = arith.constant 1.000000e+00 : f32
    %173 = vector.broadcast %cst_51 : f32 to vector<8x32xf32>
    %174 = arith.addf %173, %172 : vector<8x32xf32>
    %175 = arith.divf %173, %174 : vector<8x32xf32>
    %176 = vector.extract_strided_slice %166 {offsets = [0, 32], sizes = [8, 32], strides = [1, 1]} : vector<8x96xf32> to vector<8x32xf32>
    %177 = vector.extract_strided_slice %167 {offsets = [0, 32], sizes = [8, 32], strides = [1, 1]} : vector<8x96xf32> to vector<8x32xf32>
    %178 = arith.addf %176, %177 : vector<8x32xf32>
    %179 = arith.negf %178 : vector<8x32xf32>
    %180 = math.exp %179 : vector<8x32xf32>
    %cst_52 = arith.constant 1.000000e+00 : f32
    %181 = vector.broadcast %cst_52 : f32 to vector<8x32xf32>
    %182 = arith.addf %181, %180 : vector<8x32xf32>
    %183 = arith.divf %181, %182 : vector<8x32xf32>
    %184 = vector.extract_strided_slice %166 {offsets = [0, 64], sizes = [8, 32], strides = [1, 1]} : vector<8x96xf32> to vector<8x32xf32>
    %185 = vector.extract_strided_slice %167 {offsets = [0, 64], sizes = [8, 32], strides = [1, 1]} : vector<8x96xf32> to vector<8x32xf32>
    %186 = vector.broadcast %9 : vector<1x32xf32> to vector<8x32xf32>
    %187 = arith.addf %185, %186 : vector<8x32xf32>
    %188 = arith.mulf %175, %187 : vector<8x32xf32>
    %189 = arith.addf %184, %188 : vector<8x32xf32>
    %190 = math.tanh %189 : vector<8x32xf32>
    %cst_53 = arith.constant 1.000000e+00 : f32
    %191 = vector.broadcast %cst_53 : f32 to vector<8x32xf32>
    %192 = arith.subf %191, %183 : vector<8x32xf32>
    %193 = arith.mulf %192, %190 : vector<8x32xf32>
    %194 = arith.mulf %183, %164 : vector<8x32xf32>
    %195 = arith.addf %193, %194 : vector<8x32xf32>
    %c40_54 = arith.constant 40 : index
    %c0_55 = arith.constant 0 : index
    %196 = vector.load %arg14[%c40_54, %c0_55] : memref<56x32xf32, #tpu.memory_space<vmem>>, vector<8x32xf32>
    tpu.vector_store %arg14[%c40_54, %c0_55], %195 {strides = array<i32>} : memref<56x32xf32, #tpu.memory_space<vmem>>, vector<8x32xf32>,
    %c48 = arith.constant 48 : index
    %c0_56 = arith.constant 0 : index
    %197 = vector.load %arg13[%c48, %c0_56] : memref<56x96xf32, #tpu.memory_space<vmem>>, vector<8x96xf32>
    %cst_57 = arith.constant dense<0.000000e+00> : vector<8x96xf32>
    %198 = tpu.matmul %195, %8, %cst_57 {dimension_numbers = #tpu.dot_dimension_numbers<[1], [0], [0], [1], [0, 0, 1, 1], [], []>} : vector<8x32xf32>, vector<32x96xf32>, vector<8x96xf32> -> vector<8x96xf32>
    %199 = vector.extract_strided_slice %197 {offsets = [0, 0], sizes = [8, 32], strides = [1, 1]} : vector<8x96xf32> to vector<8x32xf32>
    %200 = vector.extract_strided_slice %198 {offsets = [0, 0], sizes = [8, 32], strides = [1, 1]} : vector<8x96xf32> to vector<8x32xf32>
    %201 = arith.addf %199, %200 : vector<8x32xf32>
    %202 = arith.negf %201 : vector<8x32xf32>
    %203 = math.exp %202 : vector<8x32xf32>
    %cst_58 = arith.constant 1.000000e+00 : f32
    %204 = vector.broadcast %cst_58 : f32 to vector<8x32xf32>
    %205 = arith.addf %204, %203 : vector<8x32xf32>
    %206 = arith.divf %204, %205 : vector<8x32xf32>
    %207 = vector.extract_strided_slice %197 {offsets = [0, 32], sizes = [8, 32], strides = [1, 1]} : vector<8x96xf32> to vector<8x32xf32>
    %208 = vector.extract_strided_slice %198 {offsets = [0, 32], sizes = [8, 32], strides = [1, 1]} : vector<8x96xf32> to vector<8x32xf32>
    %209 = arith.addf %207, %208 : vector<8x32xf32>
    %210 = arith.negf %209 : vector<8x32xf32>
    %211 = math.exp %210 : vector<8x32xf32>
    %cst_59 = arith.constant 1.000000e+00 : f32
    %212 = vector.broadcast %cst_59 : f32 to vector<8x32xf32>
    %213 = arith.addf %212, %211 : vector<8x32xf32>
    %214 = arith.divf %212, %213 : vector<8x32xf32>
    %215 = vector.extract_strided_slice %197 {offsets = [0, 64], sizes = [8, 32], strides = [1, 1]} : vector<8x96xf32> to vector<8x32xf32>
    %216 = vector.extract_strided_slice %198 {offsets = [0, 64], sizes = [8, 32], strides = [1, 1]} : vector<8x96xf32> to vector<8x32xf32>
    %217 = vector.broadcast %9 : vector<1x32xf32> to vector<8x32xf32>
    %218 = arith.addf %216, %217 : vector<8x32xf32>
    %219 = arith.mulf %206, %218 : vector<8x32xf32>
    %220 = arith.addf %215, %219 : vector<8x32xf32>
    %221 = math.tanh %220 : vector<8x32xf32>
    %cst_60 = arith.constant 1.000000e+00 : f32
    %222 = vector.broadcast %cst_60 : f32 to vector<8x32xf32>
    %223 = arith.subf %222, %214 : vector<8x32xf32>
    %224 = arith.mulf %223, %221 : vector<8x32xf32>
    %225 = arith.mulf %214, %195 : vector<8x32xf32>
    %226 = arith.addf %224, %225 : vector<8x32xf32>
    %c48_61 = arith.constant 48 : index
    %c0_62 = arith.constant 0 : index
    %227 = vector.load %arg14[%c48_61, %c0_62] : memref<56x32xf32, #tpu.memory_space<vmem>>, vector<8x32xf32>
    tpu.vector_store %arg14[%c48_61, %c0_62], %226 {strides = array<i32>} : memref<56x32xf32, #tpu.memory_space<vmem>>, vector<8x32xf32>,
    %c0_63 = arith.constant 0 : index
    %c0_64 = arith.constant 0 : index
    %228 = vector.load %arg14[%c0_63, %c0_64] : memref<56x32xf32, #tpu.memory_space<vmem>>, vector<56x32xf32>
    %c0_65 = arith.constant 0 : index
    %c0_66 = arith.constant 0 : index
    %229 = vector.load %arg6[%c0_65, %c0_66] : memref<32x32xf32, #tpu.memory_space<vmem>>, vector<32x32xf32>
    %cst_67 = arith.constant dense<0.000000e+00> : vector<56x32xf32>
    %230 = tpu.matmul %228, %229, %cst_67 {dimension_numbers = #tpu.dot_dimension_numbers<[1], [0], [0], [1], [0, 0, 1, 1], [], []>} : vector<56x32xf32>, vector<32x32xf32>, vector<56x32xf32> -> vector<56x32xf32>
    %c0_68 = arith.constant 0 : index
    %c0_69 = arith.constant 0 : index
    %231 = vector.load %arg7[%c0_68, %c0_69] : memref<1x32xf32, #tpu.memory_space<vmem>>, vector<1x32xf32>
    %232 = vector.broadcast %231 : vector<1x32xf32> to vector<56x32xf32>
    %233 = arith.addf %230, %232 : vector<56x32xf32>
    %234 = math.tanh %233 : vector<56x32xf32>
    %c0_70 = arith.constant 0 : index
    %c0_71 = arith.constant 0 : index
    %235 = vector.load %arg8[%c0_70, %c0_71] : memref<32x32xf32, #tpu.memory_space<vmem>>, vector<32x32xf32>
    %cst_72 = arith.constant dense<0.000000e+00> : vector<56x32xf32>
    %236 = tpu.matmul %234, %235, %cst_72 {dimension_numbers = #tpu.dot_dimension_numbers<[1], [0], [0], [1], [0, 0, 1, 1], [], []>} : vector<56x32xf32>, vector<32x32xf32>, vector<56x32xf32> -> vector<56x32xf32>
    %c0_73 = arith.constant 0 : index
    %c0_74 = arith.constant 0 : index
    %237 = vector.load %arg9[%c0_73, %c0_74] : memref<1x32xf32, #tpu.memory_space<vmem>>, vector<1x32xf32>
    %238 = vector.broadcast %237 : vector<1x32xf32> to vector<56x32xf32>
    %239 = arith.addf %236, %238 : vector<56x32xf32>
    %240 = vector.shape_cast %239 : vector<56x32xf32> to vector<7x8x32xf32>
    %cst_75 = arith.constant dense<0xFF800000> : vector<8x32xf32>
    %241 = vector.multi_reduction <maximumf>, %240, %cst_75 [0] : vector<7x8x32xf32> to vector<8x32xf32>
    %242 = vector.shape_cast %241 : vector<8x32xf32> to vector<1x8x32xf32>
    %243 = vector.broadcast %242 : vector<1x8x32xf32> to vector<7x8x32xf32>
    %244 = arith.subf %240, %243 : vector<7x8x32xf32>
    %245 = math.exp %244 : vector<7x8x32xf32>
    %cst_76 = arith.constant dense<0.000000e+00> : vector<8x32xf32>
    %246 = vector.multi_reduction <add>, %245, %cst_76 [0] : vector<7x8x32xf32> to vector<8x32xf32>
    %247 = vector.shape_cast %246 : vector<8x32xf32> to vector<1x8x32xf32>
    %248 = tpu.reciprocal %247 {approx = true} : vector<1x8x32xf32> -> vector<1x8x32xf32>
    %249 = vector.broadcast %248 : vector<1x8x32xf32> to vector<7x8x32xf32>
    %250 = arith.mulf %245, %249 : vector<7x8x32xf32>
    %251 = vector.shape_cast %228 : vector<56x32xf32> to vector<7x8x32xf32>
    %252 = arith.mulf %251, %250 : vector<7x8x32xf32>
    %cst_77 = arith.constant dense<0.000000e+00> : vector<8x32xf32>
    %253 = vector.multi_reduction <add>, %252, %cst_77 [0] : vector<7x8x32xf32> to vector<8x32xf32>
    %c0_78 = arith.constant 0 : index
    %c0_79 = arith.constant 0 : index
    %254 = vector.load %arg10[%c0_78, %c0_79] : memref<32x4xf32, #tpu.memory_space<vmem>>, vector<32x4xf32>
    %cst_80 = arith.constant dense<0.000000e+00> : vector<8x4xf32>
    %255 = tpu.matmul %253, %254, %cst_80 {dimension_numbers = #tpu.dot_dimension_numbers<[1], [0], [0], [1], [0, 0, 1, 1], [], []>} : vector<8x32xf32>, vector<32x4xf32>, vector<8x4xf32> -> vector<8x4xf32>
    %c0_81 = arith.constant 0 : index
    %c0_82 = arith.constant 0 : index
    %256 = vector.load %arg11[%c0_81, %c0_82] : memref<1x4xf32, #tpu.memory_space<vmem>>, vector<1x4xf32>
    %257 = vector.broadcast %256 : vector<1x4xf32> to vector<8x4xf32>
    %258 = arith.addf %255, %257 : vector<8x4xf32>
    %c0_83 = arith.constant 0 : index
    %c0_84 = arith.constant 0 : index
    %259 = vector.load %arg12[%c0_83, %c0_84] : memref<8x4xf32, #tpu.memory_space<vmem>>, vector<8x4xf32>
    tpu.vector_store %arg12[%c0_83, %c0_84], %258 {strides = array<i32>} : memref<8x4xf32, #tpu.memory_space<vmem>>, vector<8x4xf32>,
    return
  }
  func.func @transform_0(%arg0: i32) -> (i32, i32, i32) {
    %c0_i32 = arith.constant 0 : i32
    %c0_i32_0 = arith.constant 0 : i32
    %c0_i32_1 = arith.constant 0 : i32
    return %arg0, %c0_i32, %c0_i32_0 : i32, i32, i32
  }
  func.func @transform_1(%arg0: i32) -> (i32, i32) {
    %c0_i32 = arith.constant 0 : i32
    %c0_i32_0 = arith.constant 0 : i32
    %c0_i32_1 = arith.constant 0 : i32
    return %c0_i32, %c0_i32_0 : i32, i32
  }
  func.func @transform_2(%arg0: i32) -> (i32, i32) {
    %c0_i32 = arith.constant 0 : i32
    %c0_i32_0 = arith.constant 0 : i32
    %c0_i32_1 = arith.constant 0 : i32
    return %c0_i32, %c0_i32_0 : i32, i32
  }
  func.func @transform_3(%arg0: i32) -> (i32, i32) {
    %c0_i32 = arith.constant 0 : i32
    %c0_i32_0 = arith.constant 0 : i32
    %c0_i32_1 = arith.constant 0 : i32
    return %c0_i32, %c0_i32_0 : i32, i32
  }
  func.func @transform_4(%arg0: i32) -> (i32, i32) {
    %c0_i32 = arith.constant 0 : i32
    %c0_i32_0 = arith.constant 0 : i32
    %c0_i32_1 = arith.constant 0 : i32
    return %c0_i32, %c0_i32_0 : i32, i32
  }
  func.func @transform_5(%arg0: i32) -> (i32, i32) {
    %c0_i32 = arith.constant 0 : i32
    %c0_i32_0 = arith.constant 0 : i32
    %c0_i32_1 = arith.constant 0 : i32
    return %c0_i32, %c0_i32_0 : i32, i32
  }
  func.func @transform_6(%arg0: i32) -> (i32, i32) {
    %c0_i32 = arith.constant 0 : i32
    %c0_i32_0 = arith.constant 0 : i32
    %c0_i32_1 = arith.constant 0 : i32
    return %c0_i32, %c0_i32_0 : i32, i32
  }
  func.func @transform_7(%arg0: i32) -> (i32, i32) {
    %c0_i32 = arith.constant 0 : i32
    %c0_i32_0 = arith.constant 0 : i32
    %c0_i32_1 = arith.constant 0 : i32
    return %c0_i32, %c0_i32_0 : i32, i32
  }
  func.func @transform_8(%arg0: i32) -> (i32, i32) {
    %c0_i32 = arith.constant 0 : i32
    %c0_i32_0 = arith.constant 0 : i32
    %c0_i32_1 = arith.constant 0 : i32
    return %c0_i32, %c0_i32_0 : i32, i32
  }
  func.func @transform_9(%arg0: i32) -> (i32, i32) {
    %c0_i32 = arith.constant 0 : i32
    %c0_i32_0 = arith.constant 0 : i32
    %c0_i32_1 = arith.constant 0 : i32
    return %c0_i32, %c0_i32_0 : i32, i32
  }
  func.func @transform_10(%arg0: i32) -> (i32, i32) {
    %c0_i32 = arith.constant 0 : i32
    %c0_i32_0 = arith.constant 0 : i32
    %c0_i32_1 = arith.constant 0 : i32
    return %c0_i32, %c0_i32_0 : i32, i32
  }
  func.func @transform_11(%arg0: i32) -> (i32, i32) {
    %c0_i32 = arith.constant 0 : i32
    %c0_i32_0 = arith.constant 0 : i32
    return %arg0, %c0_i32 : i32, i32
  }
}

</mosaic_0001>

<llo_original>
// kernel: tpu_custom_call.1
$region0: #{tpu_custom_call.1}
  #allocation0 [shape = 'u32[]', space=smem, size = 0x4, offset = 0x4, fixed_abs, tag = 'smem constant byte address 0x4 - core index']
  #allocation1 [shape = 'u32[72,128]{1,0:T(1,128)}', space=vmem, size = 0x9000, scoped, tag = 'internal scratch']
  #allocation2 [shape = 'f32[56,96]{1,0:T(8,128)}', space=vmem, size = 0x7000, scoped, tag = 'scratch operand']
  #allocation3 [shape = 'f32[56,32]{1,0:T(8,128)}', space=vmem, size = 0x7000, scoped, tag = 'scratch operand']
  %s0 = inlined_call_operand.vmem [shape: f32[1,56,112], index: 0, kind: input, shape index: {}]
  %s1 = inlined_call_operand.vmem [shape: f32[112,96], index: 1, kind: input, shape index: {}]
  %s2 = inlined_call_operand.vmem [shape: f32[1,96], index: 2, kind: input, shape index: {}]
  %s3 = inlined_call_operand.vmem [shape: f32[32,96], index: 3, kind: input, shape index: {}]
  %s4 = inlined_call_operand.vmem [shape: f32[1,32], index: 4, kind: input, shape index: {}]
  %s5 = inlined_call_operand.vmem [shape: f32[32,32], index: 5, kind: input, shape index: {}]
  %s6 = inlined_call_operand.vmem [shape: f32[1,32], index: 6, kind: input, shape index: {}]
  %s7 = inlined_call_operand.vmem [shape: f32[32,32], index: 7, kind: input, shape index: {}]
  %s8 = inlined_call_operand.vmem [shape: f32[1,32], index: 8, kind: input, shape index: {}]
  %s9 = inlined_call_operand.vmem [shape: f32[32,4], index: 9, kind: input, shape index: {}]
  %s10 = inlined_call_operand.vmem [shape: f32[1,4], index: 10, kind: input, shape index: {}]
  %s11 = inlined_call_operand.vmem [shape: f32[8,4], index: 11, kind: output, shape index: {}]
  %s12 = sld [smem:[#allocation0]]
  $region54: #{tpu_custom_call.1} parent=0
    _
  %s14 = ssub.s32 1, %s12
  %s15 = scalar_select 0, %s14, %s12
  // Predicated region
  $region2: #{tpu_custom_call.1} parent=0 // pred_check
    _
  $region3: #{tpu_custom_call.1} parent=0 // pred_check_branch
    %17 = sbr.rel (0) target = $region5
  $region4: #{tpu_custom_call.1} parent=0 // pred_region
    _
  $region5: #{tpu_custom_call.1} parent=0 // pred_fallthru
    _
  // Predicated region
  $region6: #{tpu_custom_call.1} parent=0 // pred_check
    _
  $region7: #{tpu_custom_call.1} parent=0 // pred_check_branch
    %19 = sbr.rel (0) target = $region9
  $region8: #{tpu_custom_call.1} parent=0 // pred_region
    _
  $region9: #{tpu_custom_call.1} parent=0 // pred_fallthru
    _
  // Predicated region
  $region10: #{tpu_custom_call.1} parent=0 // pred_check
    _
  $region11: #{tpu_custom_call.1} parent=0 // pred_check_branch
    %21 = sbr.rel (0) target = $region13
  $region12: #{tpu_custom_call.1} parent=0 // pred_region
    _
  $region13: #{tpu_custom_call.1} parent=0 // pred_fallthru
    _
  // Predicated region
  $region14: #{tpu_custom_call.1} parent=0 // pred_check
    _
  $region15: #{tpu_custom_call.1} parent=0 // pred_check_branch
    %23 = sbr.rel (0) target = $region17
  $region16: #{tpu_custom_call.1} parent=0 // pred_region
    _
  $region17: #{tpu_custom_call.1} parent=0 // pred_fallthru
    _
  // Predicated region
  $region18: #{tpu_custom_call.1} parent=0 // pred_check
    _
  $region19: #{tpu_custom_call.1} parent=0 // pred_check_branch
    %25 = sbr.rel (0) target = $region21
  $region20: #{tpu_custom_call.1} parent=0 // pred_region
    _
  $region21: #{tpu_custom_call.1} parent=0 // pred_fallthru
    _
  // Predicated region
  $region22: #{tpu_custom_call.1} parent=0 // pred_check
    _
  $region23: #{tpu_custom_call.1} parent=0 // pred_check_branch
    %27 = sbr.rel (0) target = $region25
  $region24: #{tpu_custom_call.1} parent=0 // pred_region
    _
  $region25: #{tpu_custom_call.1} parent=0 // pred_fallthru
    _
  // Predicated region
  $region26: #{tpu_custom_call.1} parent=0 // pred_check
    _
  $region27: #{tpu_custom_call.1} parent=0 // pred_check_branch
    %29 = sbr.rel (0) target = $region29
  $region28: #{tpu_custom_call.1} parent=0 // pred_region
    _
  $region29: #{tpu_custom_call.1} parent=0 // pred_fallthru
    _
  // Predicated region
  $region30: #{tpu_custom_call.1} parent=0 // pred_check
    _
  $region31: #{tpu_custom_call.1} parent=0 // pred_check_branch
    %31 = sbr.rel (0) target = $region33
  $region32: #{tpu_custom_call.1} parent=0 // pred_region
    _
  $region33: #{tpu_custom_call.1} parent=0 // pred_fallthru
    _
  // Predicated region
  $region34: #{tpu_custom_call.1} parent=0 // pred_check
    _
  $region35: #{tpu_custom_call.1} parent=0 // pred_check_branch
    %33 = sbr.rel (0) target = $region37
  $region36: #{tpu_custom_call.1} parent=0 // pred_region
    _
  $region37: #{tpu_custom_call.1} parent=0 // pred_fallthru
    _
  // Predicated region
  $region38: #{tpu_custom_call.1} parent=0 // pred_check
    _
  $region39: #{tpu_custom_call.1} parent=0 // pred_check_branch
    %35 = sbr.rel (0) target = $region41
  $region40: #{tpu_custom_call.1} parent=0 // pred_region
    _
  $region41: #{tpu_custom_call.1} parent=0 // pred_fallthru
    _
  // Predicated region
  $region42: #{tpu_custom_call.1} parent=0 // pred_check
    _
  $region43: #{tpu_custom_call.1} parent=0 // pred_check_branch
    %37 = sbr.rel (0) target = $region45
  $region44: #{tpu_custom_call.1} parent=0 // pred_region
    _
  $region45: #{tpu_custom_call.1} parent=0 // pred_fallthru
    _
  %v38 = vld [vmem:[%s0] sm:$0xff]
  %v39 = vld [vmem:[%s0 + $0x8] sm:$0xff]
  %v40 = vld [vmem:[%s0 + $0x10] sm:$0xff]
  %v41 = vld [vmem:[%s0 + $0x18] sm:$0xff]
  %v42 = vld [vmem:[%s0 + $0x20] sm:$0xff]
  %v43 = vld [vmem:[%s0 + $0x28] sm:$0xff]
  %v44 = vld [vmem:[%s0 + $0x30] sm:$0xff]
  %v45 = vld [vmem:[%s1] sm:$0xff]
  %v46 = vld [vmem:[%s1 + $0x8] sm:$0xff]
  %v47 = vld [vmem:[%s1 + $0x10] sm:$0xff]
  %v48 = vld [vmem:[%s1 + $0x18] sm:$0xff]
  %v49 = vld [vmem:[%s1 + $0x20] sm:$0xff]
  %v50 = vld [vmem:[%s1 + $0x28] sm:$0xff]
  %v51 = vld [vmem:[%s1 + $0x30] sm:$0xff]
  %v52 = vld [vmem:[%s1 + $0x38] sm:$0xff]
  %v53 = vld [vmem:[%s1 + $0x40] sm:$0xff]
  %v54 = vld [vmem:[%s1 + $0x48] sm:$0xff]
  %v55 = vld [vmem:[%s1 + $0x50] sm:$0xff]
  %v56 = vld [vmem:[%s1 + $0x58] sm:$0xff]
  %v57 = vld [vmem:[%s1 + $0x60] sm:$0xff]
  %v58 = vld [vmem:[%s1 + $0x68] sm:$0xff]
  %v59 = vld [vmem:[%s2] sm:$0x1]
  %v61 = vperm.slane %v59, 0
  %vm63 = vcmask 916480
  %v65 = vsel %vm63, %v38, 0
  %v68 = vsel %vm63, %v39, 0
  %v71 = vsel %vm63, %v40, 0
  %v74 = vsel %vm63, %v41, 0
  %v77 = vsel %vm63, %v42, 0
  %v80 = vsel %vm63, %v43, 0
  %v83 = vsel %vm63, %v44, 0
  %85 = vmatpush.msra.mxu0 0.0
  %86 = vmatpush.msra.mxu0 0.0
  %87 = vmatpush.msra.mxu0 %v58
  %88 = vmatpush.msra.mxu0 %v57
  %89 = vmatpush.msra.mxu0 %v56
  %90 = vmatpush.msra.mxu0 %v55
  %91 = vmatpush.msra.mxu0 %v54
  %92 = vmatpush.msra.mxu0 %v53
  %93 = vmatpush.msra.mxu0 %v52
  %94 = vmatpush.msra.mxu0 %v51
  %95 = vmatpush.msra.mxu0 %v50
  %96 = vmatpush.msra.mxu0 %v49
  %97 = vmatpush.msra.mxu0 %v48
  %98 = vmatpush.msra.mxu0 %v47
  %99 = vmatpush.msra.mxu0 %v46
  %100 = vmatpush.msra.mxu0 %v45
  %101 = vmatmul.f32.gmra.mxu0 %v65
  %v102 = vpop.f32.mrf.mxu0
  %v103 = vadd.f32 %v61, %v102
  %104 = vmatmul.f32.gmra.mxu0 %v68
  %v105 = vpop.f32.mrf.mxu0
  %v106 = vadd.f32 %v61, %v105
  %107 = vmatmul.f32.gmra.mxu0 %v71
  %v108 = vpop.f32.mrf.mxu0
  %v109 = vadd.f32 %v61, %v108
  %110 = vmatmul.f32.gmra.mxu0 %v74
  %v111 = vpop.f32.mrf.mxu0
  %v112 = vadd.f32 %v61, %v111
  %113 = vmatmul.f32.gmra.mxu0 %v77
  %v114 = vpop.f32.mrf.mxu0
  %v115 = vadd.f32 %v61, %v114
  %116 = vmatmul.f32.gmra.mxu0 %v80
  %v117 = vpop.f32.mrf.mxu0
  %v118 = vadd.f32 %v61, %v117
  %119 = vmatmul.f32.gmra.mxu0 %v83
  %v120 = vpop.f32.mrf.mxu0
  %v121 = vadd.f32 %v61, %v120
  %122 = vdwg.mxu0
  %vm123 = vcmask 785408
  %124 = vst.msk [vmem:[#allocation2] sm:$0xff] %vm123, %v103
  %125 = vst.msk [vmem:[#allocation2 + $0x8] sm:$0xff] %vm123, %v106
  %126 = vst.msk [vmem:[#allocation2 + $0x10] sm:$0xff] %vm123, %v109
  %127 = vst.msk [vmem:[#allocation2 + $0x18] sm:$0xff] %vm123, %v112
  %128 = vst.msk [vmem:[#allocation2 + $0x20] sm:$0xff] %vm123, %v115
  %129 = vst.msk [vmem:[#allocation2 + $0x28] sm:$0xff] %vm123, %v118
  %130 = vst.msk [vmem:[#allocation2 + $0x30] sm:$0xff] %vm123, %v121
  %v131 = vld [vmem:[%s3] sm:$0xff]
  %v132 = vld [vmem:[%s3 + $0x8] sm:$0xff]
  %v133 = vld [vmem:[%s3 + $0x10] sm:$0xff]
  %v134 = vld [vmem:[%s3 + $0x18] sm:$0xff]
  %v135 = vld [vmem:[%s4] sm:$0x1]
  %v136 = vld [vmem:[#allocation2] sm:$0xff]
  %vm137 = vcmask 261120
  %v139 = vsel %vm137, 0.0, 0
  %141 = vmatpush.msra.mxu0 0.0
  %142 = vmatpush.msra.mxu0 0.0
  %143 = vmatpush.msra.mxu0 0.0
  %144 = vmatpush.msra.mxu0 0.0
  %145 = vmatpush.msra.mxu0 0.0
  %146 = vmatpush.msra.mxu0 0.0
  %147 = vmatpush.msra.mxu0 0.0
  %148 = vmatpush.msra.mxu0 0.0
  %149 = vmatpush.msra.mxu0 0.0
  %150 = vmatpush.msra.mxu0 0.0
  %151 = vmatpush.msra.mxu0 0.0
  %152 = vmatpush.msra.mxu0 0.0
  %153 = vmatpush.msra.mxu0 %v134
  %154 = vmatpush.msra.mxu0 %v133
  %155 = vmatpush.msra.mxu0 %v132
  %156 = vmatpush.msra.mxu0 %v131
  %157 = vmatmul.f32.gmra.mxu0 %v139
  %v158 = vpop.f32.mrf.mxu0
  %v159 = vadd.f32 0.0, %v158
  %160 = vdwg.mxu0
  %v161 = vadd.f32 %v136, %v159
  %v162 = vxor.u32 %v161, 2147483648
  %v163 = vmul.f32 %v162, 1.442695
  %v164 = vpow.pop %v163
  %v165 = vadd.f32 %v164, 1.0
  %v166 = vrcp.pop %v165
  %v167 = vmul.f32 %v165, %v166
  %v168 = vsub.f32 1.0, %v167
  %v169 = vmul.f32 %v166, %v168
  %v170 = vadd.f32 %v166, %v169
  %vm171 = vweird.f32 %v165
  %vm172 = vweird.f32 %v166
  %vm173 = vmor %vm171, %vm172
  %v174 = vsel %vm173, %v166, %v170
  %v175 = vand.u32 2147483647, %v165
  %vm176 = vcmp.eq.f32.partialorder %v175, 8.507059e+37
  %v177 = vand.u32 %v165, 2147483648
  %v178 = vor.u32 1.1754944e-38, %v177
  %v179 = vsel %vm176, %v178, %v174
  %v180 = vmul.f32 1.0, %v179
  %v182 = vperm.slane %v135, 0
  %183 = vrot.lane.b32.xlu0 %v182, 64
  %v184 = vpop.permute.xlu0 %183
  %v186 = vadd.f32 %v159, %v184
  %188 = vrot.lane.b32.xlu0 %v186, 64
  %v189 = vpop.permute.xlu0 %188
  %v191 = vmul.f32 %v180, %v189
  %193 = vrot.lane.b32.xlu0 %v191, 64
  %v194 = vpop.permute.xlu0 %193
  %v196 = vadd.f32 %v136, %v194
  %v197 = vtanh.pop %v196
  %v198 = vsub.f32 1.0, %v180
  %200 = vrot.lane.b32.xlu0 %v197, 96
  %v201 = vpop.permute.xlu0 %200
  %v203 = vmul.f32 %v198, %v201
  %v204 = vmul.f32 %v180, 0.0
  %v205 = vadd.f32 %v203, %v204
  %207 = vrot.lane.b32.xlu0 %v205, 96
  %v208 = vpop.permute.xlu0 %207
  %210 = vst.msk [vmem:[#allocation3] sm:$0xff] %vm137, %v208
  %v211 = vld [vmem:[#allocation2 + $0x8] sm:$0xff]
  %v212 = vsel %vm137, %v208, 0
  %214 = vmatpush.msra.mxu0 0.0
  %215 = vmatpush.msra.mxu0 0.0
  %216 = vmatpush.msra.mxu0 0.0
  %217 = vmatpush.msra.mxu0 0.0
  %218 = vmatpush.msra.mxu0 0.0
  %219 = vmatpush.msra.mxu0 0.0
  %220 = vmatpush.msra.mxu0 0.0
  %221 = vmatpush.msra.mxu0 0.0
  %222 = vmatpush.msra.mxu0 0.0
  %223 = vmatpush.msra.mxu0 0.0
  %224 = vmatpush.msra.mxu0 0.0
  %225 = vmatpush.msra.mxu0 0.0
  %226 = vmatpush.msra.mxu0 %v134
  %227 = vmatpush.msra.mxu0 %v133
  %228 = vmatpush.msra.mxu0 %v132
  %229 = vmatpush.msra.mxu0 %v131
  %230 = vmatmul.f32.gmra.mxu0 %v212
  %v231 = vpop.f32.mrf.mxu0
  %v232 = vadd.f32 0.0, %v231
  %233 = vdwg.mxu0
  %v234 = vadd.f32 %v211, %v232
  %v235 = vxor.u32 %v234, 2147483648
  %v236 = vmul.f32 %v235, 1.442695
  %v237 = vpow.pop %v236
  %v238 = vadd.f32 %v237, 1.0
  %v239 = vrcp.pop %v238
  %v240 = vmul.f32 %v238, %v239
  %v241 = vsub.f32 1.0, %v240
  %v242 = vmul.f32 %v239, %v241
  %v243 = vadd.f32 %v239, %v242
  %vm244 = vweird.f32 %v238
  %vm245 = vweird.f32 %v239
  %vm246 = vmor %vm244, %vm245
  %v247 = vsel %vm246, %v239, %v243
  %v248 = vand.u32 2147483647, %v238
  %vm249 = vcmp.eq.f32.partialorder %v248, 8.507059e+37
  %v250 = vand.u32 %v238, 2147483648
  %v251 = vor.u32 1.1754944e-38, %v250
  %v252 = vsel %vm249, %v251, %v247
  %v253 = vmul.f32 1.0, %v252
  %v254 = vadd.f32 %v232, %v184
  %256 = vrot.lane.b32.xlu0 %v254, 64
  %v257 = vpop.permute.xlu0 %256
  %v259 = vmul.f32 %v253, %v257
  %261 = vrot.lane.b32.xlu0 %v259, 64
  %v262 = vpop.permute.xlu0 %261
  %v264 = vadd.f32 %v211, %v262
  %v265 = vtanh.pop %v264
  %v266 = vsub.f32 1.0, %v253
  %268 = vrot.lane.b32.xlu0 %v265, 96
  %v269 = vpop.permute.xlu0 %268
  %v271 = vmul.f32 %v266, %v269
  %v272 = vmul.f32 %v253, %v205
  %v273 = vadd.f32 %v271, %v272
  %275 = vrot.lane.b32.xlu0 %v273, 96
  %v276 = vpop.permute.xlu0 %275
  %278 = vst.msk [vmem:[#allocation3 + $0x8] sm:$0xff] %vm137, %v276
  %v279 = vld [vmem:[#allocation2 + $0x10] sm:$0xff]
  %v280 = vsel %vm137, %v276, 0
  %282 = vmatpush.msra.mxu0 0.0
  %283 = vmatpush.msra.mxu0 0.0
  %284 = vmatpush.msra.mxu0 0.0
  %285 = vmatpush.msra.mxu0 0.0
  %286 = vmatpush.msra.mxu0 0.0
  %287 = vmatpush.msra.mxu0 0.0
  %288 = vmatpush.msra.mxu0 0.0
  %289 = vmatpush.msra.mxu0 0.0
  %290 = vmatpush.msra.mxu0 0.0
  %291 = vmatpush.msra.mxu0 0.0
  %292 = vmatpush.msra.mxu0 0.0
  %293 = vmatpush.msra.mxu0 0.0
  %294 = vmatpush.msra.mxu0 %v134
  %295 = vmatpush.msra.mxu0 %v133
  %296 = vmatpush.msra.mxu0 %v132
  %297 = vmatpush.msra.mxu0 %v131
  %298 = vmatmul.f32.gmra.mxu0 %v280
  %v299 = vpop.f32.mrf.mxu0
  %v300 = vadd.f32 0.0, %v299
  %301 = vdwg.mxu0
  %v302 = vadd.f32 %v279, %v300
  %v303 = vxor.u32 %v302, 2147483648
  %v304 = vmul.f32 %v303, 1.442695
  %v305 = vpow.pop %v304
  %v306 = vadd.f32 %v305, 1.0
  %v307 = vrcp.pop %v306
  %v308 = vmul.f32 %v306, %v307
  %v309 = vsub.f32 1.0, %v308
  %v310 = vmul.f32 %v307, %v309
  %v311 = vadd.f32 %v307, %v310
  %vm312 = vweird.f32 %v306
  %vm313 = vweird.f32 %v307
  %vm314 = vmor %vm312, %vm313
  %v315 = vsel %vm314, %v307, %v311
  %v316 = vand.u32 2147483647, %v306
  %vm317 = vcmp.eq.f32.partialorder %v316, 8.507059e+37
  %v318 = vand.u32 %v306, 2147483648
  %v319 = vor.u32 1.1754944e-38, %v318
  %v320 = vsel %vm317, %v319, %v315
  %v321 = vmul.f32 1.0, %v320
  %v322 = vadd.f32 %v300, %v184
  %324 = vrot.lane.b32.xlu0 %v322, 64
  %v325 = vpop.permute.xlu0 %324
  %v327 = vmul.f32 %v321, %v325
  %329 = vrot.lane.b32.xlu0 %v327, 64
  %v330 = vpop.permute.xlu0 %329
  %v332 = vadd.f32 %v279, %v330
  %v333 = vtanh.pop %v332
  %v334 = vsub.f32 1.0, %v321
  %336 = vrot.lane.b32.xlu0 %v333, 96
  %v337 = vpop.permute.xlu0 %336
  %v339 = vmul.f32 %v334, %v337
  %v340 = vmul.f32 %v321, %v273
  %v341 = vadd.f32 %v339, %v340
  %343 = vrot.lane.b32.xlu0 %v341, 96
  %v344 = vpop.permute.xlu0 %343
  %346 = vst.msk [vmem:[#allocation3 + $0x10] sm:$0xff] %vm137, %v344
  %v347 = vld [vmem:[#allocation2 + $0x18] sm:$0xff]
  %v348 = vsel %vm137, %v344, 0
  %350 = vmatpush.msra.mxu0 0.0
  %351 = vmatpush.msra.mxu0 0.0
  %352 = vmatpush.msra.mxu0 0.0
  %353 = vmatpush.msra.mxu0 0.0
  %354 = vmatpush.msra.mxu0 0.0
  %355 = vmatpush.msra.mxu0 0.0
  %356 = vmatpush.msra.mxu0 0.0
  %357 = vmatpush.msra.mxu0 0.0
  %358 = vmatpush.msra.mxu0 0.0
  %359 = vmatpush.msra.mxu0 0.0
  %360 = vmatpush.msra.mxu0 0.0
  %361 = vmatpush.msra.mxu0 0.0
  %362 = vmatpush.msra.mxu0 %v134
  %363 = vmatpush.msra.mxu0 %v133
  %364 = vmatpush.msra.mxu0 %v132
  %365 = vmatpush.msra.mxu0 %v131
  %366 = vmatmul.f32.gmra.mxu0 %v348
  %v367 = vpop.f32.mrf.mxu0
  %v368 = vadd.f32 0.0, %v367
  %369 = vdwg.mxu0
  %v370 = vadd.f32 %v347, %v368
  %v371 = vxor.u32 %v370, 2147483648
  %v372 = vmul.f32 %v371, 1.442695
  %v373 = vpow.pop %v372
  %v374 = vadd.f32 %v373, 1.0
  %v375 = vrcp.pop %v374
  %v376 = vmul.f32 %v374, %v375
  %v377 = vsub.f32 1.0, %v376
  %v378 = vmul.f32 %v375, %v377
  %v379 = vadd.f32 %v375, %v378
  %vm380 = vweird.f32 %v374
  %vm381 = vweird.f32 %v375
  %vm382 = vmor %vm380, %vm381
  %v383 = vsel %vm382, %v375, %v379
  %v384 = vand.u32 2147483647, %v374
  %vm385 = vcmp.eq.f32.partialorder %v384, 8.507059e+37
  %v386 = vand.u32 %v374, 2147483648
  %v387 = vor.u32 1.1754944e-38, %v386
  %v388 = vsel %vm385, %v387, %v383
  %v389 = vmul.f32 1.0, %v388
  %v390 = vadd.f32 %v368, %v184
  %392 = vrot.lane.b32.xlu0 %v390, 64
  %v393 = vpop.permute.xlu0 %392
  %v395 = vmul.f32 %v389, %v393
  %397 = vrot.lane.b32.xlu0 %v395, 64
  %v398 = vpop.permute.xlu0 %397
  %v400 = vadd.f32 %v347, %v398
  %v401 = vtanh.pop %v400
  %v402 = vsub.f32 1.0, %v389
  %404 = vrot.lane.b32.xlu0 %v401, 96
  %v405 = vpop.permute.xlu0 %404
  %v407 = vmul.f32 %v402, %v405
  %v408 = vmul.f32 %v389, %v341
  %v409 = vadd.f32 %v407, %v408
  %411 = vrot.lane.b32.xlu0 %v409, 96
  %v412 = vpop.permute.xlu0 %411
  %414 = vst.msk [vmem:[#allocation3 + $0x18] sm:$0xff] %vm137, %v412
  %v415 = vld [vmem:[#allocation2 + $0x20] sm:$0xff]
  %v416 = vsel %vm137, %v412, 0
  %418 = vmatpush.msra.mxu0 0.0
  %419 = vmatpush.msra.mxu0 0.0
  %420 = vmatpush.msra.mxu0 0.0
  %421 = vmatpush.msra.mxu0 0.0
  %422 = vmatpush.msra.mxu0 0.0
  %423 = vmatpush.msra.mxu0 0.0
  %424 = vmatpush.msra.mxu0 0.0
  %425 = vmatpush.msra.mxu0 0.0
  %426 = vmatpush.msra.mxu0 0.0
  %427 = vmatpush.msra.mxu0 0.0
  %428 = vmatpush.msra.mxu0 0.0
  %429 = vmatpush.msra.mxu0 0.0
  %430 = vmatpush.msra.mxu0 %v134
  %431 = vmatpush.msra.mxu0 %v133
  %432 = vmatpush.msra.mxu0 %v132
  %433 = vmatpush.msra.mxu0 %v131
  %434 = vmatmul.f32.gmra.mxu0 %v416
  %v435 = vpop.f32.mrf.mxu0
  %v436 = vadd.f32 0.0, %v435
  %437 = vdwg.mxu0
  %v438 = vadd.f32 %v415, %v436
  %v439 = vxor.u32 %v438, 2147483648
  %v440 = vmul.f32 %v439, 1.442695
  %v441 = vpow.pop %v440
  %v442 = vadd.f32 %v441, 1.0
  %v443 = vrcp.pop %v442
  %v444 = vmul.f32 %v442, %v443
  %v445 = vsub.f32 1.0, %v444
  %v446 = vmul.f32 %v443, %v445
  %v447 = vadd.f32 %v443, %v446
  %vm448 = vweird.f32 %v442
  %vm449 = vweird.f32 %v443
  %vm450 = vmor %vm448, %vm449
  %v451 = vsel %vm450, %v443, %v447
  %v452 = vand.u32 2147483647, %v442
  %vm453 = vcmp.eq.f32.partialorder %v452, 8.507059e+37
  %v454 = vand.u32 %v442, 2147483648
  %v455 = vor.u32 1.1754944e-38, %v454
  %v456 = vsel %vm453, %v455, %v451
  %v457 = vmul.f32 1.0, %v456
  %v458 = vadd.f32 %v436, %v184
  %460 = vrot.lane.b32.xlu0 %v458, 64
  %v461 = vpop.permute.xlu0 %460
  %v463 = vmul.f32 %v457, %v461
  %465 = vrot.lane.b32.xlu0 %v463, 64
  %v466 = vpop.permute.xlu0 %465
  %v468 = vadd.f32 %v415, %v466
  %v469 = vtanh.pop %v468
  %v470 = vsub.f32 1.0, %v457
  %472 = vrot.lane.b32.xlu0 %v469, 96
  %v473 = vpop.permute.xlu0 %472
  %v475 = vmul.f32 %v470, %v473
  %v476 = vmul.f32 %v457, %v409
  %v477 = vadd.f32 %v475, %v476
  %479 = vrot.lane.b32.xlu0 %v477, 96
  %v480 = vpop.permute.xlu0 %479
  %482 = vst.msk [vmem:[#allocation3 + $0x20] sm:$0xff] %vm137, %v480
  %v483 = vld [vmem:[#allocation2 + $0x28] sm:$0xff]
  %v484 = vsel %vm137, %v480, 0
  %486 = vmatpush.msra.mxu0 0.0
  %487 = vmatpush.msra.mxu0 0.0
  %488 = vmatpush.msra.mxu0 0.0
  %489 = vmatpush.msra.mxu0 0.0
  %490 = vmatpush.msra.mxu0 0.0
  %491 = vmatpush.msra.mxu0 0.0
  %492 = vmatpush.msra.mxu0 0.0
  %493 = vmatpush.msra.mxu0 0.0
  %494 = vmatpush.msra.mxu0 0.0
  %495 = vmatpush.msra.mxu0 0.0
  %496 = vmatpush.msra.mxu0 0.0
  %497 = vmatpush.msra.mxu0 0.0
  %498 = vmatpush.msra.mxu0 %v134
  %499 = vmatpush.msra.mxu0 %v133
  %500 = vmatpush.msra.mxu0 %v132
  %501 = vmatpush.msra.mxu0 %v131
  %502 = vmatmul.f32.gmra.mxu0 %v484
  %v503 = vpop.f32.mrf.mxu0
  %v504 = vadd.f32 0.0, %v503
  %505 = vdwg.mxu0
  %v506 = vadd.f32 %v483, %v504
  %v507 = vxor.u32 %v506, 2147483648
  %v508 = vmul.f32 %v507, 1.442695
  %v509 = vpow.pop %v508
  %v510 = vadd.f32 %v509, 1.0
  %v511 = vrcp.pop %v510
  %v512 = vmul.f32 %v510, %v511
  %v513 = vsub.f32 1.0, %v512
  %v514 = vmul.f32 %v511, %v513
  %v515 = vadd.f32 %v511, %v514
  %vm516 = vweird.f32 %v510
  %vm517 = vweird.f32 %v511
  %vm518 = vmor %vm516, %vm517
  %v519 = vsel %vm518, %v511, %v515
  %v520 = vand.u32 2147483647, %v510
  %vm521 = vcmp.eq.f32.partialorder %v520, 8.507059e+37
  %v522 = vand.u32 %v510, 2147483648
  %v523 = vor.u32 1.1754944e-38, %v522
  %v524 = vsel %vm521, %v523, %v519
  %v525 = vmul.f32 1.0, %v524
  %v526 = vadd.f32 %v504, %v184
  %528 = vrot.lane.b32.xlu0 %v526, 64
  %v529 = vpop.permute.xlu0 %528
  %v531 = vmul.f32 %v525, %v529
  %533 = vrot.lane.b32.xlu0 %v531, 64
  %v534 = vpop.permute.xlu0 %533
  %v536 = vadd.f32 %v483, %v534
  %v537 = vtanh.pop %v536
  %v538 = vsub.f32 1.0, %v525
  %540 = vrot.lane.b32.xlu0 %v537, 96
  %v541 = vpop.permute.xlu0 %540
  %v543 = vmul.f32 %v538, %v541
  %v544 = vmul.f32 %v525, %v477
  %v545 = vadd.f32 %v543, %v544
  %547 = vrot.lane.b32.xlu0 %v545, 96
  %v548 = vpop.permute.xlu0 %547
  %550 = vst.msk [vmem:[#allocation3 + $0x28] sm:$0xff] %vm137, %v548
  %v551 = vld [vmem:[#allocation2 + $0x30] sm:$0xff]
  %v552 = vsel %vm137, %v548, 0
  %554 = vmatpush.msra.mxu0 0.0
  %555 = vmatpush.msra.mxu0 0.0
  %556 = vmatpush.msra.mxu0 0.0
  %557 = vmatpush.msra.mxu0 0.0
  %558 = vmatpush.msra.mxu0 0.0
  %559 = vmatpush.msra.mxu0 0.0
  %560 = vmatpush.msra.mxu0 0.0
  %561 = vmatpush.msra.mxu0 0.0
  %562 = vmatpush.msra.mxu0 0.0
  %563 = vmatpush.msra.mxu0 0.0
  %564 = vmatpush.msra.mxu0 0.0
  %565 = vmatpush.msra.mxu0 0.0
  %566 = vmatpush.msra.mxu0 %v134
  %567 = vmatpush.msra.mxu0 %v133
  %568 = vmatpush.msra.mxu0 %v132
  %569 = vmatpush.msra.mxu0 %v131
  %570 = vmatmul.f32.gmra.mxu0 %v552
  %v571 = vpop.f32.mrf.mxu0
  %v572 = vadd.f32 0.0, %v571
  %573 = vdwg.mxu0
  %v574 = vadd.f32 %v551, %v572
  %v575 = vxor.u32 %v574, 2147483648
  %v576 = vmul.f32 %v575, 1.442695
  %v577 = vpow.pop %v576
  %v578 = vadd.f32 %v577, 1.0
  %v579 = vrcp.pop %v578
  %v580 = vmul.f32 %v578, %v579
  %v581 = vsub.f32 1.0, %v580
  %v582 = vmul.f32 %v579, %v581
  %v583 = vadd.f32 %v579, %v582
  %vm584 = vweird.f32 %v578
  %vm585 = vweird.f32 %v579
  %vm586 = vmor %vm584, %vm585
  %v587 = vsel %vm586, %v579, %v583
  %v588 = vand.u32 2147483647, %v578
  %vm589 = vcmp.eq.f32.partialorder %v588, 8.507059e+37
  %v590 = vand.u32 %v578, 2147483648
  %v591 = vor.u32 1.1754944e-38, %v590
  %v592 = vsel %vm589, %v591, %v587
  %v593 = vmul.f32 1.0, %v592
  %v594 = vadd.f32 %v572, %v184
  %596 = vrot.lane.b32.xlu0 %v594, 64
  %v597 = vpop.permute.xlu0 %596
  %v599 = vmul.f32 %v593, %v597
  %601 = vrot.lane.b32.xlu0 %v599, 64
  %v602 = vpop.permute.xlu0 %601
  %v604 = vadd.f32 %v551, %v602
  %v605 = vtanh.pop %v604
  %v606 = vsub.f32 1.0, %v593
  %608 = vrot.lane.b32.xlu0 %v605, 96
  %v609 = vpop.permute.xlu0 %608
  %v611 = vmul.f32 %v606, %v609
  %v612 = vmul.f32 %v593, %v545
  %v613 = vadd.f32 %v611, %v612
  %615 = vrot.lane.b32.xlu0 %v613, 96
  %v616 = vpop.permute.xlu0 %615
  %618 = vst.msk [vmem:[#allocation3 + $0x30] sm:$0xff] %vm137, %v616
  %v619 = vld [vmem:[#allocation3] sm:$0xff]
  %v620 = vld [vmem:[#allocation3 + $0x8] sm:$0xff]
  %v621 = vld [vmem:[#allocation3 + $0x10] sm:$0xff]
  %v622 = vld [vmem:[#allocation3 + $0x18] sm:$0xff]
  %v623 = vld [vmem:[#allocation3 + $0x20] sm:$0xff]
  %v624 = vld [vmem:[#allocation3 + $0x28] sm:$0xff]
  %v625 = vld [vmem:[#allocation3 + $0x30] sm:$0xff]
  %v626 = vld [vmem:[%s5] sm:$0xff]
  %v627 = vld [vmem:[%s5 + $0x8] sm:$0xff]
  %v628 = vld [vmem:[%s5 + $0x10] sm:$0xff]
  %v629 = vld [vmem:[%s5 + $0x18] sm:$0xff]
  %v630 = vld [vmem:[%s6] sm:$0x1]
  %v632 = vperm.slane %v630, 0
  %v635 = vsel %vm137, %v619, 0
  %v638 = vsel %vm137, %v620, 0
  %v641 = vsel %vm137, %v621, 0
  %v644 = vsel %vm137, %v622, 0
  %v647 = vsel %vm137, %v623, 0
  %v650 = vsel %vm137, %v624, 0
  %v653 = vsel %vm137, %v625, 0
  %655 = vmatpush.msra.mxu0 0.0
  %656 = vmatpush.msra.mxu0 0.0
  %657 = vmatpush.msra.mxu0 0.0
  %658 = vmatpush.msra.mxu0 0.0
  %659 = vmatpush.msra.mxu0 0.0
  %660 = vmatpush.msra.mxu0 0.0
  %661 = vmatpush.msra.mxu0 0.0
  %662 = vmatpush.msra.mxu0 0.0
  %663 = vmatpush.msra.mxu0 0.0
  %664 = vmatpush.msra.mxu0 0.0
  %665 = vmatpush.msra.mxu0 0.0
  %666 = vmatpush.msra.mxu0 0.0
  %667 = vmatpush.msra.mxu0 %v629
  %668 = vmatpush.msra.mxu0 %v628
  %669 = vmatpush.msra.mxu0 %v627
  %670 = vmatpush.msra.mxu0 %v626
  %671 = vmatmul.f32.gmra.mxu0 %v635
  %v672 = vpop.f32.mrf.mxu0
  %v673 = vadd.f32 %v632, %v672
  %674 = vmatmul.f32.gmra.mxu0 %v638
  %v675 = vpop.f32.mrf.mxu0
  %v676 = vadd.f32 %v632, %v675
  %677 = vmatmul.f32.gmra.mxu0 %v641
  %v678 = vpop.f32.mrf.mxu0
  %v679 = vadd.f32 %v632, %v678
  %680 = vmatmul.f32.gmra.mxu0 %v644
  %v681 = vpop.f32.mrf.mxu0
  %v682 = vadd.f32 %v632, %v681
  %683 = vmatmul.f32.gmra.mxu0 %v647
  %v684 = vpop.f32.mrf.mxu0
  %v685 = vadd.f32 %v632, %v684
  %686 = vmatmul.f32.gmra.mxu0 %v650
  %v687 = vpop.f32.mrf.mxu0
  %v688 = vadd.f32 %v632, %v687
  %689 = vmatmul.f32.gmra.mxu0 %v653
  %v690 = vpop.f32.mrf.mxu0
  %v691 = vadd.f32 %v632, %v690
  %692 = vdwg.mxu0
  %v693 = vtanh.pop %v673
  %v694 = vtanh.pop %v676
  %v695 = vtanh.pop %v679
  %v696 = vtanh.pop %v682
  %v697 = vtanh.pop %v685
  %v698 = vtanh.pop %v688
  %v699 = vtanh.pop %v691
  %v700 = vld [vmem:[%s7] sm:$0xff]
  %v701 = vld [vmem:[%s7 + $0x8] sm:$0xff]
  %v702 = vld [vmem:[%s7 + $0x10] sm:$0xff]
  %v703 = vld [vmem:[%s7 + $0x18] sm:$0xff]
  %v704 = vld [vmem:[%s8] sm:$0x1]
  %v706 = vperm.slane %v704, 0
  %v709 = vsel %vm137, %v693, 0
  %v712 = vsel %vm137, %v694, 0
  %v715 = vsel %vm137, %v695, 0
  %v718 = vsel %vm137, %v696, 0
  %v721 = vsel %vm137, %v697, 0
  %v724 = vsel %vm137, %v698, 0
  %v727 = vsel %vm137, %v699, 0
  %729 = vmatpush.msra.mxu0 0.0
  %730 = vmatpush.msra.mxu0 0.0
  %731 = vmatpush.msra.mxu0 0.0
  %732 = vmatpush.msra.mxu0 0.0
  %733 = vmatpush.msra.mxu0 0.0
  %734 = vmatpush.msra.mxu0 0.0
  %735 = vmatpush.msra.mxu0 0.0
  %736 = vmatpush.msra.mxu0 0.0
  %737 = vmatpush.msra.mxu0 0.0
  %738 = vmatpush.msra.mxu0 0.0
  %739 = vmatpush.msra.mxu0 0.0
  %740 = vmatpush.msra.mxu0 0.0
  %741 = vmatpush.msra.mxu0 %v703
  %742 = vmatpush.msra.mxu0 %v702
  %743 = vmatpush.msra.mxu0 %v701
  %744 = vmatpush.msra.mxu0 %v700
  %745 = vmatmul.f32.gmra.mxu0 %v709
  %v746 = vpop.f32.mrf.mxu0
  %v747 = vadd.f32 %v706, %v746
  %748 = vmatmul.f32.gmra.mxu0 %v712
  %v749 = vpop.f32.mrf.mxu0
  %v750 = vadd.f32 %v706, %v749
  %751 = vmatmul.f32.gmra.mxu0 %v715
  %v752 = vpop.f32.mrf.mxu0
  %v753 = vadd.f32 %v706, %v752
  %754 = vmatmul.f32.gmra.mxu0 %v718
  %v755 = vpop.f32.mrf.mxu0
  %v756 = vadd.f32 %v706, %v755
  %757 = vmatmul.f32.gmra.mxu0 %v721
  %v758 = vpop.f32.mrf.mxu0
  %v759 = vadd.f32 %v706, %v758
  %760 = vmatmul.f32.gmra.mxu0 %v724
  %v761 = vpop.f32.mrf.mxu0
  %v762 = vadd.f32 %v706, %v761
  %763 = vmatmul.f32.gmra.mxu0 %v727
  %v764 = vpop.f32.mrf.mxu0
  %v765 = vadd.f32 %v706, %v764
  %766 = vdwg.mxu0
  %v767 = vsel %vm137, %v747, -inf
  %v768 = vsel %vm137, %v750, -inf
  %v769 = vsel %vm137, %v753, -inf
  %v770 = vsel %vm137, %v756, -inf
  %v771 = vsel %vm137, %v759, -inf
  %v772 = vmax.f32 %v767, %v771
  %v773 = vsel %vm137, %v762, -inf
  %v774 = vmax.f32 %v768, %v773
  %v775 = vsel %vm137, %v765, -inf
  %v776 = vmax.f32 %v769, %v775
  %v777 = vmax.f32 %v772, %v774
  %v778 = vmax.f32 %v776, %v770
  %v779 = vmax.f32 %v777, %v778
  %v780 = vsub.f32 %v747, %v779
  %v781 = vsub.f32 %v750, %v779
  %v782 = vsub.f32 %v753, %v779
  %v783 = vsub.f32 %v756, %v779
  %v784 = vsub.f32 %v759, %v779
  %v785 = vsub.f32 %v762, %v779
  %v786 = vsub.f32 %v765, %v779
  %v787 = vmul.f32 %v780, 1.442695
  %v788 = vpow.pop %v787
  %v789 = vmul.f32 %v781, 1.442695
  %v790 = vpow.pop %v789
  %v791 = vmul.f32 %v782, 1.442695
  %v792 = vpow.pop %v791
  %v793 = vmul.f32 %v783, 1.442695
  %v794 = vpow.pop %v793
  %v795 = vmul.f32 %v784, 1.442695
  %v796 = vpow.pop %v795
  %v797 = vmul.f32 %v785, 1.442695
  %v798 = vpow.pop %v797
  %v799 = vmul.f32 %v786, 1.442695
  %v800 = vpow.pop %v799
  %v801 = vsel %vm137, %v788, 0.0
  %v802 = vsel %vm137, %v790, 0.0
  %v803 = vadd.f32 %v801, %v802
  %v804 = vsel %vm137, %v792, 0.0
  %v805 = vadd.f32 %v803, %v804
  %v806 = vsel %vm137, %v794, 0.0
  %v807 = vadd.f32 %v805, %v806
  %v808 = vsel %vm137, %v796, 0.0
  %v809 = vadd.f32 %v807, %v808
  %v810 = vsel %vm137, %v798, 0.0
  %v811 = vadd.f32 %v809, %v810
  %v812 = vsel %vm137, %v800, 0.0
  %v813 = vadd.f32 %v811, %v812
  %v814 = vrcp.pop %v813
  %v815 = vmul.f32 %v788, %v814
  %v816 = vmul.f32 %v790, %v814
  %v817 = vmul.f32 %v792, %v814
  %v818 = vmul.f32 %v794, %v814
  %v819 = vmul.f32 %v796, %v814
  %v820 = vmul.f32 %v798, %v814
  %v821 = vmul.f32 %v800, %v814
  %v822 = vmul.f32 %v619, %v815
  %v823 = vmul.f32 %v620, %v816
  %v824 = vmul.f32 %v621, %v817
  %v825 = vmul.f32 %v622, %v818
  %v826 = vmul.f32 %v623, %v819
  %v827 = vmul.f32 %v624, %v820
  %v828 = vmul.f32 %v625, %v821
  %v829 = vsel %vm137, %v822, 0.0
  %v830 = vsel %vm137, %v823, 0.0
  %v831 = vadd.f32 %v829, %v830
  %v832 = vsel %vm137, %v824, 0.0
  %v833 = vadd.f32 %v831, %v832
  %v834 = vsel %vm137, %v825, 0.0
  %v835 = vadd.f32 %v833, %v834
  %v836 = vsel %vm137, %v826, 0.0
  %v837 = vadd.f32 %v835, %v836
  %v838 = vsel %vm137, %v827, 0.0
  %v839 = vadd.f32 %v837, %v838
  %v840 = vsel %vm137, %v828, 0.0
  %v841 = vadd.f32 %v839, %v840
  %v842 = vld [vmem:[%s9] sm:$0xff]
  %v843 = vld [vmem:[%s9 + $0x8] sm:$0xff]
  %v844 = vld [vmem:[%s9 + $0x10] sm:$0xff]
  %v845 = vld [vmem:[%s9 + $0x18] sm:$0xff]
  %v846 = vld [vmem:[%s10] sm:$0x1]
  %v848 = vperm.slane %v846, 0
  %v851 = vsel %vm137, %v841, 0
  %853 = vmatpush.msra.mxu0 0.0
  %854 = vmatpush.msra.mxu0 0.0
  %855 = vmatpush.msra.mxu0 0.0
  %856 = vmatpush.msra.mxu0 0.0
  %857 = vmatpush.msra.mxu0 0.0
  %858 = vmatpush.msra.mxu0 0.0
  %859 = vmatpush.msra.mxu0 0.0
  %860 = vmatpush.msra.mxu0 0.0
  %861 = vmatpush.msra.mxu0 0.0
  %862 = vmatpush.msra.mxu0 0.0
  %863 = vmatpush.msra.mxu0 0.0
  %864 = vmatpush.msra.mxu0 0.0
  %865 = vmatpush.msra.mxu0 %v845
  %866 = vmatpush.msra.mxu0 %v844
  %867 = vmatpush.msra.mxu0 %v843
  %868 = vmatpush.msra.mxu0 %v842
  %869 = vmatmul.f32.gmra.mxu0 %v851
  %v870 = vpop.f32.mrf.mxu0
  %v871 = vadd.f32 %v848, %v870
  %872 = vdwg.mxu0
  %vm873 = vcmask 31744
  %874 = vst.msk [vmem:[%s11] sm:$0xff] %vm873, %v871
  // Predicated region
  $region46: #{tpu_custom_call.1} parent=0 // pred_check
    _
  $region47: #{tpu_custom_call.1} parent=0 // pred_check_branch
    %876 = sbr.rel (0) target = $region49
  $region48: #{tpu_custom_call.1} parent=0 // pred_region
    _
  $region49: #{tpu_custom_call.1} parent=0 // pred_fallthru
    _
  // Predicated region
  $region50: #{tpu_custom_call.1} parent=0 // pred_check
    _
  $region51: #{tpu_custom_call.1} parent=0 // pred_check_branch
    %878 = sbr.rel (0) target = $region53
  $region52: #{tpu_custom_call.1} parent=0 // pred_region
    _
  $region53: #{tpu_custom_call.1} parent=0 // pred_fallthru
    _

</llo_original>
